<compile_context>
chip_gen: v7x
topology: tpu7x:2x2x1
jax: 0.10.0
libtpu: 0.0.40
codegen_flags: <defaults>
</compile_context>

<pallas_src>
import numpy as np
import jax
import jax.numpy as jnp
from jax.experimental import pallas as pl
from jax.experimental.pallas import tpu as pltpu

EPS = 1e-5
NEG_SLOPE = 0.2
TARGET_TILE_M = 2048                 # target matmul rows per grid step
VMEM_BUDGET = 12 * 1024 * 1024       # conservative: fits v5e 16 MiB scoped default

# Sub-pixel decomposition of ConvTranspose2d(k=4, s=2, p=1):
# output row 2A+p reads input row A+dh with kernel row kh, where for tap th:
#   dh = th*(2p-1),  kh = KH[p][th].   Same table for columns / q / tw.
KH = ((1, 3), (2, 0))


def _pick_tile_rows(total_rows, w, cap_rows):
    """Largest tile_rows dividing total_rows with (tile_rows*w) % 8 == 0,
    under cap_rows, preferring >= 2 tiles so both v7x TensorCores get work."""
    cap = max(1, min(total_rows, cap_rows))
    if total_rows >= 2:
        cap = max(1, min(cap, total_rows // 2))
    for d in range(cap, 0, -1):
        if total_rows % d == 0 and (d * w) % 8 == 0:
            return d
    return total_rows                 # single full block is always legal


# ----------------------------------------------------------------------------
# Kernel A: BatchNorm statistics only (no activation write).
#   x_ref : (tile_m, 9*Cin)      bf16   shared 3x3 im2col block
#   w_ref : (2, 9*Cin, 2*Cout)   bf16   per-row-phase weight matrices
#   s_ref : (2, 2*Cout)          f32    [per-column sum ; sum-of-squares]
# ----------------------------------------------------------------------------
def deconv_stats_kernel(x_ref, w_ref, s_ref):
    x = x_ref[...]
    tot = None
    for p in range(2):                                   # row-phase, unrolled
        r = jnp.dot(x, w_ref[p], preferred_element_type=jnp.float32)
        s1 = jnp.sum(r, axis=0, keepdims=True)
        s2 = jnp.sum(r * r, axis=0, keepdims=True)       # single-pass sumsq; see note
        cur = jnp.concatenate([s1, s2], axis=0)
        tot = cur if tot is None else tot + cur
    s_ref[...] = tot


# ----------------------------------------------------------------------------
# Kernel B: fused deconv (recomputed) + BatchNorm-apply + LeakyReLU(0.2).
#   o_ref : (tile_rows, 2, W, 2*Cout) f32 -- free-reshapes to NHWC afterwards.
# ----------------------------------------------------------------------------
def deconv_bn_act_kernel(x_ref, w_ref, scale_ref, shift_ref, o_ref):
    x = x_ref[...]
    sc = scale_ref[...]
    sh = shift_ref[...]
    rows, _, w_dim, c2 = o_ref.shape
    for p in range(2):                                   # row-phase, unrolled
        r = jnp.dot(x, w_ref[p], preferred_element_type=jnp.float32)
        z = r * sc + sh
        z = jnp.where(z >= 0.0, z, NEG_SLOPE * z)
        o_ref[:, p, :, :] = z.reshape(rows, w_dim, c2)   # major-dim split only


def dc_up_block(x_nchw, weight, bias, gamma, beta):
    """DCUpBlock forward: ConvTranspose2d(4,2,1) -> BatchNorm2d(train) -> LeakyReLU(0.2).

    x_nchw : (N, Cin, H, W) f32
    weight : (Cin, Cout, 4, 4)   (PyTorch ConvTranspose2d layout)
    bias   : (Cout,)  -- cancelled exactly by train-mode BN mean subtraction
    gamma, beta : (Cout,)
    returns: (N, Cout, 2H, 2W) f32
    """
    del bias
    N, Cin, H, W = x_nchw.shape
    Cout = weight.shape[1]
    K = 9 * Cin                       # folded taps: K dimension of the matmul
    C2 = 2 * Cout                     # matmul N-dim per row-phase, columns (q, co)

    # ---- glue: NCHW -> NHWC bf16, zero pad, shared 3x3 im2col (one pass).
    x = jnp.transpose(x_nchw, (0, 2, 3, 1)).astype(jnp.bfloat16)
    xp = jnp.pad(x, ((0, 0), (1, 1), (1, 1), (0, 0)))
    M = N * H * W
    cols = [xp[:, 1 + dh:1 + dh + H, 1 + dw:1 + dw + W, :]
            for dh in (-1, 0, 1) for dw in (-1, 0, 1)]
    x_cols = jnp.concatenate(cols, axis=-1).reshape(M, K)          # (M, 9*Cin) bf16

    # ---- weights: ConvTranspose2d(4,2,1) == 3x3 conv with 4*Cout outputs.
    # Row order (dh, dw, ci) matches x_cols; column order (q, co); one matrix
    # per row-phase p.  Invalid taps for a phase stay zero.
    w = jnp.zeros((2, 2, 9, Cin, Cout), jnp.float32)               # (p, q, tap, ci, co)
    for p in range(2):
        for q in range(2):
            for th in range(2):
                dh = th * (2 * p - 1)
                for tw in range(2):
                    dw = tw * (2 * q - 1)
                    tap = (dh + 1) * 3 + (dw + 1)
                    w = w.at[p, q, tap].set(weight[:, :, KH[p][th], KH[q][tw]])
    w_mat = jnp.transpose(w, (0, 2, 3, 1, 4)).reshape(2, K, C2).astype(jnp.bfloat16)

    # ---- tiling: whole input image rows per tile; VMEM-budgeted; >=2 tiles when possible.
    total_rows = N * H
    per_pixel_vmem = 2 * (K * 2) + 2 * (4 * Cout * 4)    # dbl-buffered in + out blocks
    cap_rows = max(1, min(TARGET_TILE_M // max(W, 1),
                          VMEM_BUDGET // max(per_pixel_vmem * W, 1)))
    tile_rows = _pick_tile_rows(total_rows, W, cap_rows)
    tile_m = tile_rows * W
    num_m = total_rows // tile_rows

    cparams = pltpu.CompilerParams(
        dimension_semantics=("parallel",),
        vmem_limit_bytes=32 * 1024 * 1024)
    flops = 2 * M * K * 2 * C2

    # ---- Kernel A: per-tile BN statistics (no activation materialized).
    stats = pl.pallas_call(
        deconv_stats_kernel,
        out_shape=jax.ShapeDtypeStruct((num_m, 2, C2), jnp.float32),
        grid=(num_m,),
        in_specs=[
            pl.BlockSpec((tile_m, K), lambda m: (m, 0)),
            pl.BlockSpec((2, K, C2), lambda m: (0, 0, 0)),
        ],
        out_specs=pl.BlockSpec((None, 2, C2), lambda m: (m, 0, 0)),
        compiler_params=cparams,
        cost_estimate=pl.CostEstimate(
            flops=flops, transcendentals=0,
            bytes_accessed=M * K * 2 + 2 * K * C2 * 2 + num_m * 2 * C2 * 4),
    )(x_cols, w_mat)

    # ---- global BatchNorm statistics + scale/shift fold (tiny, plain JAX).
    # NOTE: single-pass sum/sumsq can cancel for var << mean^2 at very large
    # N*H*W; switch to a shifted/two-pass formulation for production sizes.
    m_out = 4.0 * M                                       # = N * 2H * 2W
    tot = jnp.sum(stats, axis=0).reshape(2, 2, Cout).sum(axis=1)   # (2, Cout)
    mean = tot[0] / m_out
    var = jnp.maximum(tot[1] / m_out - mean * mean, 0.0)  # biased (BN train mode)
    scale = gamma.astype(jnp.float32) * jax.lax.rsqrt(var + EPS)
    shift = beta.astype(jnp.float32) - mean * scale
    scale_col = jnp.tile(scale, 2).reshape(1, C2)         # column order (q, co)
    shift_col = jnp.tile(shift, 2).reshape(1, C2)

    # ---- Kernel B: recompute deconv, apply BN + LeakyReLU, write NHWC-reshapeable layout.
    y = pl.pallas_call(
        deconv_bn_act_kernel,
        out_shape=jax.ShapeDtypeStruct((total_rows, 2, W, C2), jnp.float32),
        grid=(num_m,),
        in_specs=[
            pl.BlockSpec((tile_m, K), lambda m: (m, 0)),
            pl.BlockSpec((2, K, C2), lambda m: (0, 0, 0)),
            pl.BlockSpec((1, C2), lambda m: (0, 0)),
            pl.BlockSpec((1, C2), lambda m: (0, 0)),
        ],
        out_specs=pl.BlockSpec((tile_rows, 2, W, C2), lambda m: (m, 0, 0, 0)),
        compiler_params=cparams,
        cost_estimate=pl.CostEstimate(
            flops=flops, transcendentals=0,
            bytes_accessed=M * K * 2 + 2 * K * C2 * 2 + 4 * M * Cout * 4),
    )(x_cols, w_mat, scale_col, shift_col)

    # (N*H, 2, W, 2*Cout) -> (N, 2H, 2W, Cout): contiguous (free) reshape;
    # row index = 2A+p, col index = 2B+q by construction.
    out_nhwc = y.reshape(N, 2 * H, 2 * W, Cout)
    return jnp.transpose(out_nhwc, (0, 3, 1, 2))          # final NCHW


# ----------------------------------------------------------------------------
# Pure-JAX reference for the module semantics.  The Pallas path feeds the MXU
# with bf16 operands, so the reference applies the same bf16 rounding to
# x / weight; everything downstream stays f32.
# ----------------------------------------------------------------------------
def reference(x_nchw, weight, bias, gamma, beta):
    xq = x_nchw.astype(jnp.bfloat16).astype(jnp.float32)
    wq = weight.astype(jnp.bfloat16).astype(jnp.float32)
    wt = jnp.transpose(wq, (1, 0, 2, 3))[:, :, ::-1, ::-1]   # (Cout, Cin, 4, 4)
    y = jax.lax.conv_general_dilated(
        xq, wt, window_strides=(1, 1), padding=((2, 2), (2, 2)),
        lhs_dilation=(2, 2), rhs_dilation=(1, 1),
        dimension_numbers=("NCHW", "OIHW", "NCHW"),
        precision=jax.lax.Precision.HIGHEST)
    y = y + bias[None, :, None, None]
    mean = y.mean(axis=(0, 2, 3), keepdims=True)
    var = y.var(axis=(0, 2, 3), keepdims=True)               # biased, like BN train
    z = (y - mean) / jnp.sqrt(var + EPS)
    z = z * gamma[None, :, None, None] + beta[None, :, None, None]
    return jnp.where(z >= 0, z, NEG_SLOPE * z)


if __name__ == "__main__":
    key = jax.random.PRNGKey(0)
    k1, k2, k3, k4, k5 = jax.random.split(key, 5)

    N, Cin, H, W = 2, 4, 16, 16
    Cout = 8

    x = jax.random.normal(k1, (N, Cin, H, W), dtype=jnp.float32)
    weight = 0.1 * jax.random.normal(k2, (Cin, Cout, 4, 4), dtype=jnp.float32)
    bias = 0.1 * jax.random.normal(k3, (Cout,), dtype=jnp.float32)
    gamma = 1.0 + 0.1 * jax.random.normal(k4, (Cout,), dtype=jnp.float32)
    beta = 0.1 * jax.random.normal(k5, (Cout,), dtype=jnp.float32)

    out = jax.block_until_ready(jax.jit(dc_up_block)(x, weight, bias, gamma, beta))
    ref = jax.block_until_ready(reference(x, weight, bias, gamma, beta))

    assert out.shape == (N, Cout, 2 * H, 2 * W), out.shape
    np.testing.assert_allclose(np.asarray(out), np.asarray(ref),
                               rtol=1e-4, atol=1e-4)
    print("KERNEL_OK")
</pallas_src>

<mosaic_0001>
module attributes {stable_mosaic.version = 11 : i64} {
  func.func @deconv_stats_kernel(%arg0: i32, %arg1: memref<256x36xbf16, #tpu.memory_space<vmem>>, %arg2: memref<2x36x16xbf16, #tpu.memory_space<vmem>>, %arg3: memref<1x2x16xf32, #tpu.memory_space<vmem>>) attributes {dimension_semantics = [#tpu.dimension_semantics<parallel>], iteration_bounds = array<i64: 2>, scalar_prefetch = 0 : i64, scratch_operands = 0 : i64, tpu.core_type = #tpu.core_type<tc>, window_params = [{transform_indices = @transform_0, window_bounds = array<i64: 256, 36>}, {pipeline_mode = #tpu.pipeline_mode<synchronous>, transform_indices = @transform_1, window_bounds = array<i64: 2, 36, 16>}, {transform_indices = @transform_2, window_bounds = array<i64: 1, 2, 16>}]} {
    %c0 = arith.constant 0 : index
    %c0_0 = arith.constant 0 : index
    %0 = vector.load %arg1[%c0, %c0_0] : memref<256x36xbf16, #tpu.memory_space<vmem>>, vector<256x36xbf16>
    %c0_1 = arith.constant 0 : index
    %c0_2 = arith.constant 0 : index
    %c0_3 = arith.constant 0 : index
    %1 = vector.load %arg2[%c0_1, %c0_2, %c0_3] : memref<2x36x16xbf16, #tpu.memory_space<vmem>>, vector<1x36x16xbf16>
    %2 = vector.shape_cast %1 : vector<1x36x16xbf16> to vector<36x16xbf16>
    %cst = arith.constant dense<0.000000e+00> : vector<256x16xf32>
    %3 = tpu.matmul %0, %2, %cst {dimension_numbers = #tpu.dot_dimension_numbers<[1], [0], [0], [1], [0, 0, 1, 1], [], []>} : vector<256x36xbf16>, vector<36x16xbf16>, vector<256x16xf32> -> vector<256x16xf32>
    %cst_4 = arith.constant dense<0.000000e+00> : vector<16xf32>
    %4 = vector.multi_reduction <add>, %3, %cst_4 [0] : vector<256x16xf32> to vector<16xf32>
    %5 = vector.shape_cast %4 : vector<16xf32> to vector<1x16xf32>
    %6 = arith.mulf %3, %3 : vector<256x16xf32>
    %cst_5 = arith.constant dense<0.000000e+00> : vector<16xf32>
    %7 = vector.multi_reduction <add>, %6, %cst_5 [0] : vector<256x16xf32> to vector<16xf32>
    %8 = vector.shape_cast %7 : vector<16xf32> to vector<1x16xf32>
    %9 = tpu.concatenate %5, %8 in 0 : vector<1x16xf32>, vector<1x16xf32> -> vector<2x16xf32>
    %c1 = arith.constant 1 : index
    %c0_6 = arith.constant 0 : index
    %c0_7 = arith.constant 0 : index
    %10 = vector.load %arg2[%c1, %c0_6, %c0_7] : memref<2x36x16xbf16, #tpu.memory_space<vmem>>, vector<1x36x16xbf16>
    %11 = vector.shape_cast %10 : vector<1x36x16xbf16> to vector<36x16xbf16>
    %cst_8 = arith.constant dense<0.000000e+00> : vector<256x16xf32>
    %12 = tpu.matmul %0, %11, %cst_8 {dimension_numbers = #tpu.dot_dimension_numbers<[1], [0], [0], [1], [0, 0, 1, 1], [], []>} : vector<256x36xbf16>, vector<36x16xbf16>, vector<256x16xf32> -> vector<256x16xf32>
    %cst_9 = arith.constant dense<0.000000e+00> : vector<16xf32>
    %13 = vector.multi_reduction <add>, %12, %cst_9 [0] : vector<256x16xf32> to vector<16xf32>
    %14 = vector.shape_cast %13 : vector<16xf32> to vector<1x16xf32>
    %15 = arith.mulf %12, %12 : vector<256x16xf32>
    %cst_10 = arith.constant dense<0.000000e+00> : vector<16xf32>
    %16 = vector.multi_reduction <add>, %15, %cst_10 [0] : vector<256x16xf32> to vector<16xf32>
    %17 = vector.shape_cast %16 : vector<16xf32> to vector<1x16xf32>
    %18 = tpu.concatenate %14, %17 in 0 : vector<1x16xf32>, vector<1x16xf32> -> vector<2x16xf32>
    %19 = arith.addf %9, %18 : vector<2x16xf32>
    %c0_11 = arith.constant 0 : index
    %c0_12 = arith.constant 0 : index
    %c0_13 = arith.constant 0 : index
    %20 = vector.load %arg3[%c0_11, %c0_12, %c0_13] : memref<1x2x16xf32, #tpu.memory_space<vmem>>, vector<1x2x16xf32>
    %21 = vector.shape_cast %20 : vector<1x2x16xf32> to vector<2x16xf32>
    %22 = vector.shape_cast %19 : vector<2x16xf32> to vector<1x2x16xf32>
    tpu.vector_store %arg3[%c0_11, %c0_12, %c0_13], %22 {strides = array<i32>} : memref<1x2x16xf32, #tpu.memory_space<vmem>>, vector<1x2x16xf32>,
    return
  }
  func.func @transform_0(%arg0: i32) -> (i32, i32) {
    %c0_i32 = arith.constant 0 : i32
    %c0_i32_0 = arith.constant 0 : i32
    return %arg0, %c0_i32 : i32, i32
  }
  func.func @transform_1(%arg0: i32) -> (i32, i32, i32) {
    %c0_i32 = arith.constant 0 : i32
    %c0_i32_0 = arith.constant 0 : i32
    %c0_i32_1 = arith.constant 0 : i32
    %c0_i32_2 = arith.constant 0 : i32
    return %c0_i32, %c0_i32_0, %c0_i32_1 : i32, i32, i32
  }
  func.func @transform_2(%arg0: i32) -> (i32, i32, i32) {
    %c0_i32 = arith.constant 0 : i32
    %c0_i32_0 = arith.constant 0 : i32
    %c0_i32_1 = arith.constant 0 : i32
    return %arg0, %c0_i32, %c0_i32_0 : i32, i32, i32
  }
}

module attributes {stable_mosaic.version = 11 : i64} {
  func.func @deconv_bn_act_kernel(%arg0: i32, %arg1: memref<256x36xbf16, #tpu.memory_space<vmem>>, %arg2: memref<2x36x16xbf16, #tpu.memory_space<vmem>>, %arg3: memref<1x16xf32, #tpu.memory_space<vmem>>, %arg4: memref<1x16xf32, #tpu.memory_space<vmem>>, %arg5: memref<16x2x16x16xf32, #tpu.memory_space<vmem>>) attributes {dimension_semantics = [#tpu.dimension_semantics<parallel>], iteration_bounds = array<i64: 2>, scalar_prefetch = 0 : i64, scratch_operands = 0 : i64, tpu.core_type = #tpu.core_type<tc>, window_params = [{transform_indices = @transform_0, window_bounds = array<i64: 256, 36>}, {pipeline_mode = #tpu.pipeline_mode<synchronous>, transform_indices = @transform_1, window_bounds = array<i64: 2, 36, 16>}, {pipeline_mode = #tpu.pipeline_mode<synchronous>, transform_indices = @transform_2, window_bounds = array<i64: 1, 16>}, {pipeline_mode = #tpu.pipeline_mode<synchronous>, transform_indices = @transform_3, window_bounds = array<i64: 1, 16>}, {transform_indices = @transform_4, window_bounds = array<i64: 16, 2, 16, 16>}]} {
    %c0 = arith.constant 0 : index
    %c0_0 = arith.constant 0 : index
    %0 = vector.load %arg1[%c0, %c0_0] : memref<256x36xbf16, #tpu.memory_space<vmem>>, vector<256x36xbf16>
    %c0_1 = arith.constant 0 : index
    %c0_2 = arith.constant 0 : index
    %1 = vector.load %arg3[%c0_1, %c0_2] : memref<1x16xf32, #tpu.memory_space<vmem>>, vector<1x16xf32>
    %c0_3 = arith.constant 0 : index
    %c0_4 = arith.constant 0 : index
    %2 = vector.load %arg4[%c0_3, %c0_4] : memref<1x16xf32, #tpu.memory_space<vmem>>, vector<1x16xf32>
    %c0_5 = arith.constant 0 : index
    %c0_6 = arith.constant 0 : index
    %c0_7 = arith.constant 0 : index
    %3 = vector.load %arg2[%c0_5, %c0_6, %c0_7] : memref<2x36x16xbf16, #tpu.memory_space<vmem>>, vector<1x36x16xbf16>
    %4 = vector.shape_cast %3 : vector<1x36x16xbf16> to vector<36x16xbf16>
    %cst = arith.constant dense<0.000000e+00> : vector<256x16xf32>
    %5 = tpu.matmul %0, %4, %cst {dimension_numbers = #tpu.dot_dimension_numbers<[1], [0], [0], [1], [0, 0, 1, 1], [], []>} : vector<256x36xbf16>, vector<36x16xbf16>, vector<256x16xf32> -> vector<256x16xf32>
    %6 = vector.broadcast %1 : vector<1x16xf32> to vector<256x16xf32>
    %7 = arith.mulf %5, %6 : vector<256x16xf32>
    %8 = vector.broadcast %2 : vector<1x16xf32> to vector<256x16xf32>
    %9 = arith.addf %7, %8 : vector<256x16xf32>
    %cst_8 = arith.constant 0.000000e+00 : f32
    %10 = vector.broadcast %cst_8 : f32 to vector<256x16xf32>
    %11 = arith.cmpf oge, %9, %10 : vector<256x16xf32>
    %cst_9 = arith.constant 2.000000e-01 : f32
    %12 = vector.broadcast %cst_9 : f32 to vector<256x16xf32>
    %13 = arith.mulf %12, %9 : vector<256x16xf32>
    %14 = arith.select %11, %9, %13 : vector<256x16xi1>, vector<256x16xf32>
    %15 = vector.shape_cast %14 : vector<256x16xf32> to vector<16x16x16xf32>
    %c0_10 = arith.constant 0 : index
    %c0_11 = arith.constant 0 : index
    %c0_12 = arith.constant 0 : index
    %c0_13 = arith.constant 0 : index
    %16 = vector.load %arg5[%c0_10, %c0_11, %c0_12, %c0_13] : memref<16x2x16x16xf32, #tpu.memory_space<vmem>>, vector<16x1x16x16xf32>
    %17 = vector.shape_cast %16 : vector<16x1x16x16xf32> to vector<16x16x16xf32>
    %18 = vector.shape_cast %15 : vector<16x16x16xf32> to vector<16x1x16x16xf32>
    tpu.vector_store %arg5[%c0_10, %c0_11, %c0_12, %c0_13], %18 {strides = array<i32>} : memref<16x2x16x16xf32, #tpu.memory_space<vmem>>, vector<16x1x16x16xf32>,
    %c1 = arith.constant 1 : index
    %c0_14 = arith.constant 0 : index
    %c0_15 = arith.constant 0 : index
    %19 = vector.load %arg2[%c1, %c0_14, %c0_15] : memref<2x36x16xbf16, #tpu.memory_space<vmem>>, vector<1x36x16xbf16>
    %20 = vector.shape_cast %19 : vector<1x36x16xbf16> to vector<36x16xbf16>
    %cst_16 = arith.constant dense<0.000000e+00> : vector<256x16xf32>
    %21 = tpu.matmul %0, %20, %cst_16 {dimension_numbers = #tpu.dot_dimension_numbers<[1], [0], [0], [1], [0, 0, 1, 1], [], []>} : vector<256x36xbf16>, vector<36x16xbf16>, vector<256x16xf32> -> vector<256x16xf32>
    %22 = vector.broadcast %1 : vector<1x16xf32> to vector<256x16xf32>
    %23 = arith.mulf %21, %22 : vector<256x16xf32>
    %24 = vector.broadcast %2 : vector<1x16xf32> to vector<256x16xf32>
    %25 = arith.addf %23, %24 : vector<256x16xf32>
    %cst_17 = arith.constant 0.000000e+00 : f32
    %26 = vector.broadcast %cst_17 : f32 to vector<256x16xf32>
    %27 = arith.cmpf oge, %25, %26 : vector<256x16xf32>
    %cst_18 = arith.constant 2.000000e-01 : f32
    %28 = vector.broadcast %cst_18 : f32 to vector<256x16xf32>
    %29 = arith.mulf %28, %25 : vector<256x16xf32>
    %30 = arith.select %27, %25, %29 : vector<256x16xi1>, vector<256x16xf32>
    %31 = vector.shape_cast %30 : vector<256x16xf32> to vector<16x16x16xf32>
    %c0_19 = arith.constant 0 : index
    %c1_20 = arith.constant 1 : index
    %c0_21 = arith.constant 0 : index
    %c0_22 = arith.constant 0 : index
    %32 = vector.load %arg5[%c0_19, %c1_20, %c0_21, %c0_22] : memref<16x2x16x16xf32, #tpu.memory_space<vmem>>, vector<16x1x16x16xf32>
    %33 = vector.shape_cast %32 : vector<16x1x16x16xf32> to vector<16x16x16xf32>
    %34 = vector.shape_cast %31 : vector<16x16x16xf32> to vector<16x1x16x16xf32>
    tpu.vector_store %arg5[%c0_19, %c1_20, %c0_21, %c0_22], %34 {strides = array<i32>} : memref<16x2x16x16xf32, #tpu.memory_space<vmem>>, vector<16x1x16x16xf32>,
    return
  }
  func.func @transform_0(%arg0: i32) -> (i32, i32) {
    %c0_i32 = arith.constant 0 : i32
    %c0_i32_0 = arith.constant 0 : i32
    return %arg0, %c0_i32 : i32, i32
  }
  func.func @transform_1(%arg0: i32) -> (i32, i32, i32) {
    %c0_i32 = arith.constant 0 : i32
    %c0_i32_0 = arith.constant 0 : i32
    %c0_i32_1 = arith.constant 0 : i32
    %c0_i32_2 = arith.constant 0 : i32
    return %c0_i32, %c0_i32_0, %c0_i32_1 : i32, i32, i32
  }
  func.func @transform_2(%arg0: i32) -> (i32, i32) {
    %c0_i32 = arith.constant 0 : i32
    %c0_i32_0 = arith.constant 0 : i32
    %c0_i32_1 = arith.constant 0 : i32
    return %c0_i32, %c0_i32_0 : i32, i32
  }
  func.func @transform_3(%arg0: i32) -> (i32, i32) {
    %c0_i32 = arith.constant 0 : i32
    %c0_i32_0 = arith.constant 0 : i32
    %c0_i32_1 = arith.constant 0 : i32
    return %c0_i32, %c0_i32_0 : i32, i32
  }
  func.func @transform_4(%arg0: i32) -> (i32, i32, i32, i32) {
    %c0_i32 = arith.constant 0 : i32
    %c0_i32_0 = arith.constant 0 : i32
    %c0_i32_1 = arith.constant 0 : i32
    %c0_i32_2 = arith.constant 0 : i32
    return %arg0, %c0_i32, %c0_i32_0, %c0_i32_1 : i32, i32, i32, i32
  }
}

</mosaic_0001>

<llo_original>
// kernel: tile.18
$region0: #{tile.18}
  #allocation0 [shape = 's32[1]{0}', space=sflag, size = 0x4, scoped, tag = 'scoped memory for tile.18']
  %s0 = inlined_call_operand.vmem [shape: f32[8], index: 0, kind: input, shape index: {}]
  %s1 = inlined_call_operand.vmem [shape: f32[2,8], index: 1, kind: output, shape index: {}]
  // Predicated region
  $region2: #{tile.18} parent=0 // pred_check
    _
  $region3: #{tile.18} parent=0 // pred_check_branch
    %3 = sbr.rel (0) target = $region5
  $region4: #{tile.18} parent=0 // pred_region
    _
  $region5: #{tile.18} parent=0 // pred_fallthru
    _
  %v4 = vld [vmem:[%s0] ss:$0 sm:$0xff]
  %5 = vst [vmem:[%s1] sm:$0x3] %v4

// kernel: tile.19
$region0: #{tile.19}
  %s0 = inlined_call_operand.vmem [shape: f32[2,8], index: 0, kind: input, shape index: {}]
  %s1 = inlined_call_operand.vmem [shape: f32[1,16], index: 1, kind: output, shape index: {}]
  $region1: #{tile.19} parent=0
    #allocation0 [shape = 'u8[4096]{0}', space=vmem, size = 0x1000, scoped, tag = 'scoped mem for output reshape']
    #allocation1 [shape = 'u8[4096]{0}', space=vmem, size = 0x1000, scoped, tag = 'scoped mem for input reshape']
    %s3 = sshllo.u32 0, 2
    %v4 = vld [vmem:[%s0] sm:%s3]
    %5 = vst [vmem:[#allocation1] sm:%s3] %v4
    %v6 = vld [vmem:[#allocation1] sm:$0x1]
    %vm7 = vcmask 64512
    %8 = vst.msk [vmem:[#allocation0] sm:$0x1] %vm7, %v6
    %s9 = scalar_lea.vmem [#allocation1], 1
    %v10 = vld [vmem:[%s9] sm:$0x1]
    %11 = vrot.lane.b32.xlu0 %v10, 8
    %v12 = vpop.permute.xlu0 %11
    %vm13 = vcmask 130112
    %14 = vst.msk [vmem:[#allocation0] sm:$0x1] %vm13, %v12
    %s16 = sshllo.u32 0, 1
    %v18 = vld [vmem:[#allocation0] sm:%s16]
    %s19 = sshllo.u32 0, 1
    %20 = vst [vmem:[%s1] sm:%s19] %v18

// kernel: dc_up_block.2
$region0: #{dc_up_block.2}
  #allocation0 [shape = 'u32[]', space=smem, size = 0x4, offset = 0x4, fixed_abs, tag = 'smem constant byte address 0x4 - core index']
  #allocation1 [shape = 'u32[144,128]{1,0:T(1,128)}', space=vmem, size = 0x12000, scoped, tag = 'internal scratch']
  %s0 = inlined_call_operand.vmem [shape: bf16[512,36], index: 0, kind: input, shape index: {}]
  %s1 = inlined_call_operand.vmem [shape: bf16[2,36,16], index: 1, kind: input, shape index: {}]
  %s2 = inlined_call_operand.vmem [shape: f32[2,2,16], index: 2, kind: output, shape index: {}]
  %s3 = sld [smem:[#allocation0]]
  $region41: #{dc_up_block.2} parent=0
    _
  %s5 = ssub.s32 1, %s3
  %s6 = scalar_select 0, %s5, %s3
  loop: start=0, step=1, limit=4
  $region2: #{dc_up_block.2} parent=0 // loop_pre_header
    _
  $region3: #{dc_up_block.2} parent=0 // loop_header
    %s8 = sphi 0, %s12
    %p9 = scmp.ge.s32.totalorder %s8, 4
    %s18 = sphi 0, %s20
    %s21 = sphi 0, %s18
    %s22 = sphi 0, %s21
    %s38 = sphi 0, %s22
    %s42 = sphi 0, %s42
    %s44 = sphi 0, %s42
    %s45 = sphi 0, %s44
    %s59 = sphi 0, %s45
    %s65 = sphi 0, %s67
    %s68 = sphi 0, %s65
    %s69 = sphi 0, %s68
    %s85 = sphi 0, %s69
  $region4: #{dc_up_block.2} parent=0 // loop_header_branch
    %11 = sbr.rel (%p9) target = $region8
  $region5: #{dc_up_block.2} parent=0 // loop_body
    %s13 = ssub.s32 %s8, 1
    %s14 = ssub.s32 %s8, 2
    %s15 = sadd.s32 %s8, 1
    %s16 = ssub.s32 %s8, %s15
    %p17 = scmp.eq.s32.totalorder %s16, 0
    %s19 = sadd.s32 %s18, 1
    %s20 = scalar_select %p17, %s18, %s19
    %p23 = pneg %p17
    %p24 = scmp.eq.s32.totalorder %s8, 1
    %p25 = por %p23, %p24
    %p26 = scmp.ne.s32.totalorder %s18, %s21
    %p27 = scmp.eq.s32.totalorder %s8, 0
    %p28 = por %p26, %p27
    %p29 = scmp.ne.s32.totalorder %s18, %s21
    %p30 = scmp.eq.s32.totalorder %s13, 1
    %p31 = por %p29, %p30
    %p32 = scmp.ne.s32.totalorder %s21, %s22
    %p33 = scmp.eq.s32.totalorder %s13, 0
    %p34 = por %p32, %p33
    %p35 = scmp.ne.s32.totalorder %s21, %s22
    %p36 = scmp.eq.s32.totalorder %s14, 1
    %p37 = por %p35, %p36
    %p39 = scmp.ne.s32.totalorder %s22, %s38
    %p40 = scmp.eq.s32.totalorder %s14, 0
    %p41 = por %p39, %p40
    %s43 = sadd.s32 %s42, 1
    %p46 = scmp.eq.s32.totalorder %s8, 1
    %p47 = scmp.ne.s32.totalorder %s42, %s44
    %p48 = scmp.eq.s32.totalorder %s8, 0
    %p49 = por %p47, %p48
    %p50 = scmp.ne.s32.totalorder %s42, %s44
    %p51 = scmp.eq.s32.totalorder %s13, 1
    %p52 = por %p50, %p51
    %p53 = scmp.ne.s32.totalorder %s44, %s45
    %p54 = scmp.eq.s32.totalorder %s13, 0
    %p55 = por %p53, %p54
    %p56 = scmp.ne.s32.totalorder %s44, %s45
    %p57 = scmp.eq.s32.totalorder %s14, 1
    %p58 = por %p56, %p57
    %p60 = scmp.ne.s32.totalorder %s45, %s59
    %p61 = scmp.eq.s32.totalorder %s14, 0
    %p62 = por %p60, %p61
    %s63 = ssub.s32 %s8, %s15
    %p64 = scmp.eq.s32.totalorder %s63, 0
    %s66 = sadd.s32 %s65, 1
    %s67 = scalar_select %p64, %s65, %s66
    %p70 = pneg %p64
    %p71 = scmp.eq.s32.totalorder %s8, 1
    %p72 = por %p70, %p71
    %p73 = scmp.ne.s32.totalorder %s65, %s68
    %p74 = scmp.eq.s32.totalorder %s8, 0
    %p75 = por %p73, %p74
    %p76 = scmp.ne.s32.totalorder %s65, %s68
    %p77 = scmp.eq.s32.totalorder %s13, 1
    %p78 = por %p76, %p77
    %p79 = scmp.ne.s32.totalorder %s68, %s69
    %p80 = scmp.eq.s32.totalorder %s13, 0
    %p81 = por %p79, %p80
    %p82 = scmp.ne.s32.totalorder %s68, %s69
    %p83 = scmp.eq.s32.totalorder %s14, 1
    %p84 = por %p82, %p83
    %p86 = scmp.ne.s32.totalorder %s69, %s85
    %p87 = scmp.eq.s32.totalorder %s14, 0
    %p88 = por %p86, %p87
    %p89 = scmp.le.s32.totalorder 1, %s8
    %p90 = scmp.lt.s32.totalorder %s8, 3
    %p91 = pnand %p89, %p90
    %p92 = pneg %p91
    // Predicated region
    $region9: #{dc_up_block.2} parent=5 // pred_check
      _
    $region10: #{dc_up_block.2} parent=5 // pred_check_branch
      %94 = sbr.rel (%p91) target = $region12
    $region11: #{dc_up_block.2} parent=5 // pred_region
      %s95 = ssub.s32 %s8, 1
      // Predicated region
      $region13: #{dc_up_block.2} parent=11 // pred_check
        %p96 = pneg %p55
      $region14: #{dc_up_block.2} parent=11 // pred_check_branch
        %98 = sbr.rel (%p96) target = $region16
      $region15: #{dc_up_block.2} parent=11 // pred_region
        _
      $region16: #{dc_up_block.2} parent=11 // pred_fallthru
        _
    $region12: #{dc_up_block.2} parent=5 // pred_fallthru
      _
    %p99 = scmp.lt.s32.totalorder %s8, 2
    // Predicated region
    $region17: #{dc_up_block.2} parent=5 // pred_check
      %p100 = pneg %p99
    $region18: #{dc_up_block.2} parent=5 // pred_check_branch
      %102 = sbr.rel (%p100) target = $region20
    $region19: #{dc_up_block.2} parent=5 // pred_region
      // Predicated region
      $region21: #{dc_up_block.2} parent=19 // pred_check
        %p103 = pneg %p28
      $region22: #{dc_up_block.2} parent=19 // pred_check_branch
        %105 = sbr.rel (%p103) target = $region24
      $region23: #{dc_up_block.2} parent=19 // pred_region
        %s106 = smul.u32 32, %s8
        %p107 = scmp.lt.s32.totalorder %s106, 63
        %s108 = scalar_select %p107, %s106, 63
        %s109 = smul.addr %s108, 4
        %s110 = scalar_lea.vmem %s0, %s109
        %s111 = smul.u32 32, %s8
      $region24: #{dc_up_block.2} parent=19 // pred_fallthru
        _
    $region20: #{dc_up_block.2} parent=5 // pred_fallthru
      _
    %p112 = scmp.le.s32.totalorder 1, %s8
    %p113 = scmp.lt.s32.totalorder %s8, 3
    %p114 = pnand %p112, %p113
    %p115 = pneg %p114
    // Predicated region
    $region25: #{dc_up_block.2} parent=5 // pred_check
      _
    $region26: #{dc_up_block.2} parent=5 // pred_check_branch
      %117 = sbr.rel (%p114) target = $region28
    $region27: #{dc_up_block.2} parent=5 // pred_region
      %s118 = ssub.s32 %s8, 1
      %s119 = smul.u32 32, %s13
      %p120 = scmp.lt.s32.totalorder %s119, 63
      %s121 = scalar_select %p120, %s119, 63
      %s122 = smul.addr %s121, 4
      %s123 = scalar_lea.vmem %s0, %s122
      %p124 = pneg %p34
      %p125 = pneg %p31
      %p126 = pneg %p55
      %p127 = pneg %p52
      %p128 = pneg %p81
      %p129 = pneg %p78
      %p130 = scmp.lt.s32.totalorder %s13, 1
      %s131 = scalar_select %p130, %s13, 1
      %s132 = smul.addr %s131, 2
      %s133 = scalar_lea.vmem %s2, %s132
      %s134 = smul.u32 32, %s13
      %p135 = scmp.lt.s32.totalorder %s134, 63
      %s136 = scalar_select %p135, %s134, 63
      %s137 = smul.addr %s136, 4
      %s138 = scalar_lea.vmem %s0, %s137
      %s139 = smul.u32 32, %s13
      %p140 = scmp.lt.s32.totalorder %s13, 1
      %s141 = scalar_select %p140, %s13, 1
      %s142 = smul.addr %s141, 2
      %s143 = scalar_lea.vmem %s2, %s142
      %v145 = vld [vmem:[%s138] sm:$0xf]
      %v146 = vld [vmem:[%s138 + $0x4] sm:$0xf]
      %v147 = vld [vmem:[%s138 + $0x8] sm:$0xf]
      %v148 = vld [vmem:[%s138 + $0xc] sm:$0xf]
      %v149 = vld [vmem:[%s138 + $0x10] sm:$0xf]
      %v150 = vld [vmem:[%s138 + $0x14] sm:$0xf]
      %v151 = vld [vmem:[%s138 + $0x18] sm:$0xf]
      %v152 = vld [vmem:[%s138 + $0x1c] sm:$0xf]
      %v153 = vld [vmem:[%s138 + $0x20] sm:$0xf]
      %v154 = vld [vmem:[%s138 + $0x24] sm:$0xf]
      %v155 = vld [vmem:[%s138 + $0x28] sm:$0xf]
      %v156 = vld [vmem:[%s138 + $0x2c] sm:$0xf]
      %v157 = vld [vmem:[%s138 + $0x30] sm:$0xf]
      %v158 = vld [vmem:[%s138 + $0x34] sm:$0xf]
      %v159 = vld [vmem:[%s138 + $0x38] sm:$0xf]
      %v160 = vld [vmem:[%s138 + $0x3c] sm:$0xf]
      %v161 = vld [vmem:[%s138 + $0x40] sm:$0xf]
      %v162 = vld [vmem:[%s138 + $0x44] sm:$0xf]
      %v163 = vld [vmem:[%s138 + $0x48] sm:$0xf]
      %v164 = vld [vmem:[%s138 + $0x4c] sm:$0xf]
      %v165 = vld [vmem:[%s138 + $0x50] sm:$0xf]
      %v166 = vld [vmem:[%s138 + $0x54] sm:$0xf]
      %v167 = vld [vmem:[%s138 + $0x58] sm:$0xf]
      %v168 = vld [vmem:[%s138 + $0x5c] sm:$0xf]
      %v169 = vld [vmem:[%s138 + $0x60] sm:$0xf]
      %v170 = vld [vmem:[%s138 + $0x64] sm:$0xf]
      %v171 = vld [vmem:[%s138 + $0x68] sm:$0xf]
      %v172 = vld [vmem:[%s138 + $0x6c] sm:$0xf]
      %v173 = vld [vmem:[%s138 + $0x70] sm:$0xf]
      %v174 = vld [vmem:[%s138 + $0x74] sm:$0xf]
      %v175 = vld [vmem:[%s138 + $0x78] sm:$0xf]
      %v176 = vld [vmem:[%s138 + $0x7c] sm:$0xf]
      %v177 = vld [vmem:[%s1] sm:$0xf]
      %v178 = vld [vmem:[%s1 + $0x4] sm:$0xf]
      %v179 = vld [vmem:[%s1 + $0x8] sm:$0xf]
      %v180 = vld [vmem:[%s1 + $0xc] sm:$0xf]
      %v181 = vld [vmem:[%s1 + $0x10] sm:$0x3]
      %v214 = vunpack.c.l.b16 %v145
      %v215 = vunpack.c.l.b16 %v146
      %v216 = vunpack.c.l.b16 %v147
      %v217 = vunpack.c.l.b16 %v148
      %v218 = vunpack.c.l.b16 %v149
      %v219 = vunpack.c.l.b16 %v150
      %v220 = vunpack.c.l.b16 %v151
      %v221 = vunpack.c.l.b16 %v152
      %v222 = vunpack.c.l.b16 %v153
      %v223 = vunpack.c.l.b16 %v154
      %v224 = vunpack.c.l.b16 %v155
      %v225 = vunpack.c.l.b16 %v156
      %v226 = vunpack.c.l.b16 %v157
      %v227 = vunpack.c.l.b16 %v158
      %v228 = vunpack.c.l.b16 %v159
      %v229 = vunpack.c.l.b16 %v160
      %v230 = vunpack.c.l.b16 %v161
      %v231 = vunpack.c.l.b16 %v162
      %v232 = vunpack.c.l.b16 %v163
      %v233 = vunpack.c.l.b16 %v164
      %v234 = vunpack.c.l.b16 %v165
      %v235 = vunpack.c.l.b16 %v166
      %v236 = vunpack.c.l.b16 %v167
      %v237 = vunpack.c.l.b16 %v168
      %v238 = vunpack.c.l.b16 %v169
      %v239 = vunpack.c.l.b16 %v170
      %v240 = vunpack.c.l.b16 %v171
      %v241 = vunpack.c.l.b16 %v172
      %v242 = vunpack.c.l.b16 %v173
      %v243 = vunpack.c.l.b16 %v174
      %v244 = vunpack.c.l.b16 %v175
      %v245 = vunpack.c.l.b16 %v176
      %v246 = vpack.c.b16 %v215, %v214
      %v247 = vpack.c.b16 %v217, %v216
      %v248 = vpack.c.b16 %v219, %v218
      %v249 = vpack.c.b16 %v221, %v220
      %v250 = vpack.c.b16 %v223, %v222
      %v251 = vpack.c.b16 %v225, %v224
      %v252 = vpack.c.b16 %v227, %v226
      %v253 = vpack.c.b16 %v229, %v228
      %v254 = vpack.c.b16 %v231, %v230
      %v255 = vpack.c.b16 %v233, %v232
      %v256 = vpack.c.b16 %v235, %v234
      %v257 = vpack.c.b16 %v237, %v236
      %v258 = vpack.c.b16 %v239, %v238
      %v259 = vpack.c.b16 %v241, %v240
      %v260 = vpack.c.b16 %v243, %v242
      %v261 = vpack.c.b16 %v245, %v244
      %v267 = vunpack.c.l.b16 %v177
      %v268 = vunpack.c.l.b16 %v178
      %v269 = vunpack.c.l.b16 %v179
      %v270 = vunpack.c.l.b16 %v180
      %v271 = vunpack.c.l.b16 %v181
      %v272 = vpack.c.b16 %v268, %v267
      %v273 = vpack.c.b16 %v270, %v269
      %v274 = vpack.c.b16 %v271, %v271
      %vm277 = vcmask 293888
      %v279 = vsel %vm277, %v246, 0
      %v282 = vsel %vm277, %v247, 0
      %v285 = vsel %vm277, %v248, 0
      %v288 = vsel %vm277, %v249, 0
      %v291 = vsel %vm277, %v250, 0
      %v294 = vsel %vm277, %v251, 0
      %v297 = vsel %vm277, %v252, 0
      %v300 = vsel %vm277, %v253, 0
      %v303 = vsel %vm277, %v254, 0
      %v306 = vsel %vm277, %v255, 0
      %v309 = vsel %vm277, %v256, 0
      %v312 = vsel %vm277, %v257, 0
      %v315 = vsel %vm277, %v258, 0
      %v318 = vsel %vm277, %v259, 0
      %v321 = vsel %vm277, %v260, 0
      %v324 = vsel %vm277, %v261, 0
      %vm326 = vcmask 1041408
      %v328 = vsel %vm326, %v274, 0
      %330 = vmatprep.subr.bf16.mxu0 0
      %331 = vmatpush1.bf16.msra.mxu0 %v272
      %332 = vmatprep.subr.bf16.mxu0 0
      %333 = vmatpush1.bf16.msra.mxu0 %v273
      %334 = vmatprep.subr.bf16.mxu0 0
      %335 = vmatpush1.bf16.msra.mxu0 %v328
      %336 = vmatprep.subr.bf16.mxu0 0
      %337 = vmatpush1.bf16.msra.mxu0 0
      %338 = vmatprep.subr.bf16.mxu0 0
      %339 = vmatpush1.bf16.msra.mxu0 0
      %340 = vmatprep.subr.bf16.mxu0 0
      %341 = vmatpush1.bf16.msra.mxu0 0
      %342 = vmatprep.subr.bf16.mxu0 0
      %343 = vmatpush1.bf16.msra.mxu0 0
      %344 = vmatprep.subr.bf16.mxu0 0
      %345 = vmatpush1.bf16.msra.mxu0 0
      %346 = vmatprep.subr.bf16.mxu0 0
      %347 = vmatpush1.bf16.msra.mxu0 0
      %348 = vmatprep.subr.bf16.mxu0 0
      %349 = vmatpush1.bf16.msra.mxu0 0
      %350 = vmatprep.subr.bf16.mxu0 0
      %351 = vmatpush1.bf16.msra.mxu0 0
      %352 = vmatprep.subr.bf16.mxu0 0
      %353 = vmatpush1.bf16.msra.mxu0 0
      %354 = vmatprep.subr.bf16.mxu0 0
      %355 = vmatpush1.bf16.msra.mxu0 0
      %356 = vmatprep.subr.bf16.mxu0 0
      %357 = vmatpush1.bf16.msra.mxu0 0
      %358 = vmatprep.subr.bf16.mxu0 0
      %359 = vmatpush1.bf16.msra.mxu0 0
      %360 = vmatprep.subr.bf16.mxu0 0
      %361 = vmatpush1.bf16.msra.mxu0 0
      %362 = vmatprep.mubr.bf16.mxu0 0
      %363 = vmatmul.mubr.bf16.gmra.mrb[0].mxu0 %v279
      %v364 = vpop.f32.mrb[0].mxu0
      %v365 = vadd.f32 0.0, %v364
      %v366 = vpop.f32.mrb[0].mxu0
      %v367 = vpop.f32.mrb[0].mxu0
      %v368 = vadd.f32 0.0, %v367
      %v369 = vpop.f32.mrb[0].mxu0
      %370 = vmatprep.mubr.bf16.mxu0 0
      %371 = vmatmul.mubr.bf16.gmra.mrb[0].mxu0 %v282
      %v372 = vpop.f32.mrb[0].mxu0
      %v373 = vadd.f32 0.0, %v372
      %v374 = vpop.f32.mrb[0].mxu0
      %v375 = vpop.f32.mrb[0].mxu0
      %v376 = vadd.f32 0.0, %v375
      %v377 = vpop.f32.mrb[0].mxu0
      %378 = vmatprep.mubr.bf16.mxu0 0
      %379 = vmatmul.mubr.bf16.gmra.mrb[0].mxu0 %v285
      %v380 = vpop.f32.mrb[0].mxu0
      %v381 = vadd.f32 0.0, %v380
      %v382 = vpop.f32.mrb[0].mxu0
      %v383 = vpop.f32.mrb[0].mxu0
      %v384 = vadd.f32 0.0, %v383
      %v385 = vpop.f32.mrb[0].mxu0
      %386 = vmatprep.mubr.bf16.mxu0 0
      %387 = vmatmul.mubr.bf16.gmra.mrb[0].mxu0 %v288
      %v388 = vpop.f32.mrb[0].mxu0
      %v389 = vadd.f32 0.0, %v388
      %v390 = vpop.f32.mrb[0].mxu0
      %v391 = vpop.f32.mrb[0].mxu0
      %v392 = vadd.f32 0.0, %v391
      %v393 = vpop.f32.mrb[0].mxu0
      %394 = vmatprep.mubr.bf16.mxu0 0
      %395 = vmatmul.mubr.bf16.gmra.mrb[0].mxu0 %v291
      %v396 = vpop.f32.mrb[0].mxu0
      %v397 = vadd.f32 0.0, %v396
      %v398 = vpop.f32.mrb[0].mxu0
      %v399 = vpop.f32.mrb[0].mxu0
      %v400 = vadd.f32 0.0, %v399
      %v401 = vpop.f32.mrb[0].mxu0
      %402 = vmatprep.mubr.bf16.mxu0 0
      %403 = vmatmul.mubr.bf16.gmra.mrb[0].mxu0 %v294
      %v404 = vpop.f32.mrb[0].mxu0
      %v405 = vadd.f32 0.0, %v404
      %v406 = vpop.f32.mrb[0].mxu0
      %v407 = vpop.f32.mrb[0].mxu0
      %v408 = vadd.f32 0.0, %v407
      %v409 = vpop.f32.mrb[0].mxu0
      %410 = vmatprep.mubr.bf16.mxu0 0
      %411 = vmatmul.mubr.bf16.gmra.mrb[0].mxu0 %v297
      %v412 = vpop.f32.mrb[0].mxu0
      %v413 = vadd.f32 0.0, %v412
      %v414 = vpop.f32.mrb[0].mxu0
      %v415 = vpop.f32.mrb[0].mxu0
      %v416 = vadd.f32 0.0, %v415
      %v417 = vpop.f32.mrb[0].mxu0
      %418 = vmatprep.mubr.bf16.mxu0 0
      %419 = vmatmul.mubr.bf16.gmra.mrb[0].mxu0 %v300
      %v420 = vpop.f32.mrb[0].mxu0
      %v421 = vadd.f32 0.0, %v420
      %v422 = vpop.f32.mrb[0].mxu0
      %v423 = vpop.f32.mrb[0].mxu0
      %v424 = vadd.f32 0.0, %v423
      %v425 = vpop.f32.mrb[0].mxu0
      %426 = vmatprep.mubr.bf16.mxu0 0
      %427 = vmatmul.mubr.bf16.gmra.mrb[0].mxu0 %v303
      %v428 = vpop.f32.mrb[0].mxu0
      %v429 = vadd.f32 0.0, %v428
      %v430 = vpop.f32.mrb[0].mxu0
      %v431 = vpop.f32.mrb[0].mxu0
      %v432 = vadd.f32 0.0, %v431
      %v433 = vpop.f32.mrb[0].mxu0
      %434 = vmatprep.mubr.bf16.mxu0 0
      %435 = vmatmul.mubr.bf16.gmra.mrb[0].mxu0 %v306
      %v436 = vpop.f32.mrb[0].mxu0
      %v437 = vadd.f32 0.0, %v436
      %v438 = vpop.f32.mrb[0].mxu0
      %v439 = vpop.f32.mrb[0].mxu0
      %v440 = vadd.f32 0.0, %v439
      %v441 = vpop.f32.mrb[0].mxu0
      %442 = vmatprep.mubr.bf16.mxu0 0
      %443 = vmatmul.mubr.bf16.gmra.mrb[0].mxu0 %v309
      %v444 = vpop.f32.mrb[0].mxu0
      %v445 = vadd.f32 0.0, %v444
      %v446 = vpop.f32.mrb[0].mxu0
      %v447 = vpop.f32.mrb[0].mxu0
      %v448 = vadd.f32 0.0, %v447
      %v449 = vpop.f32.mrb[0].mxu0
      %450 = vmatprep.mubr.bf16.mxu0 0
      %451 = vmatmul.mubr.bf16.gmra.mrb[0].mxu0 %v312
      %v452 = vpop.f32.mrb[0].mxu0
      %v453 = vadd.f32 0.0, %v452
      %v454 = vpop.f32.mrb[0].mxu0
      %v455 = vpop.f32.mrb[0].mxu0
      %v456 = vadd.f32 0.0, %v455
      %v457 = vpop.f32.mrb[0].mxu0
      %458 = vmatprep.mubr.bf16.mxu0 0
      %459 = vmatmul.mubr.bf16.gmra.mrb[0].mxu0 %v315
      %v460 = vpop.f32.mrb[0].mxu0
      %v461 = vadd.f32 0.0, %v460
      %v462 = vpop.f32.mrb[0].mxu0
      %v463 = vpop.f32.mrb[0].mxu0
      %v464 = vadd.f32 0.0, %v463
      %v465 = vpop.f32.mrb[0].mxu0
      %466 = vmatprep.mubr.bf16.mxu0 0
      %467 = vmatmul.mubr.bf16.gmra.mrb[0].mxu0 %v318
      %v468 = vpop.f32.mrb[0].mxu0
      %v469 = vadd.f32 0.0, %v468
      %v470 = vpop.f32.mrb[0].mxu0
      %v471 = vpop.f32.mrb[0].mxu0
      %v472 = vadd.f32 0.0, %v471
      %v473 = vpop.f32.mrb[0].mxu0
      %474 = vmatprep.mubr.bf16.mxu0 0
      %475 = vmatmul.mubr.bf16.gmra.mrb[0].mxu0 %v321
      %v476 = vpop.f32.mrb[0].mxu0
      %v477 = vadd.f32 0.0, %v476
      %v478 = vpop.f32.mrb[0].mxu0
      %v479 = vpop.f32.mrb[0].mxu0
      %v480 = vadd.f32 0.0, %v479
      %v481 = vpop.f32.mrb[0].mxu0
      %482 = vmatprep.mubr.bf16.mxu0 0
      %483 = vmatmul.mubr.bf16.gmra.mrb[0].mxu0 %v324
      %v484 = vpop.f32.mrb[0].mxu0
      %v485 = vadd.f32 0.0, %v484
      %v486 = vpop.f32.mrb[0].mxu0
      %v487 = vpop.f32.mrb[0].mxu0
      %v488 = vadd.f32 0.0, %v487
      %v489 = vpop.f32.mrb[0].mxu0
      %490 = vdwg.mxu0
      %vm491 = vcmask 130048
      %v492 = vsel %vm491, %v365, 0.0
      %v493 = vsel %vm491, %v368, 0.0
      %v494 = vadd.f32 %v492, %v493
      %v495 = vsel %vm491, %v373, 0.0
      %v496 = vadd.f32 %v494, %v495
      %v497 = vsel %vm491, %v376, 0.0
      %v498 = vadd.f32 %v496, %v497
      %v499 = vsel %vm491, %v381, 0.0
      %v500 = vadd.f32 %v498, %v499
      %v501 = vsel %vm491, %v384, 0.0
      %v502 = vadd.f32 %v500, %v501
      %v503 = vsel %vm491, %v389, 0.0
      %v504 = vadd.f32 %v502, %v503
      %v505 = vsel %vm491, %v392, 0.0
      %v506 = vadd.f32 %v504, %v505
      %v507 = vsel %vm491, %v397, 0.0
      %v508 = vadd.f32 %v506, %v507
      %v509 = vsel %vm491, %v400, 0.0
      %v510 = vadd.f32 %v508, %v509
      %v511 = vsel %vm491, %v405, 0.0
      %v512 = vadd.f32 %v510, %v511
      %v513 = vsel %vm491, %v408, 0.0
      %v514 = vadd.f32 %v512, %v513
      %v515 = vsel %vm491, %v413, 0.0
      %v516 = vadd.f32 %v514, %v515
      %v517 = vsel %vm491, %v416, 0.0
      %v518 = vadd.f32 %v516, %v517
      %v519 = vsel %vm491, %v421, 0.0
      %v520 = vadd.f32 %v518, %v519
      %v521 = vsel %vm491, %v424, 0.0
      %v522 = vadd.f32 %v520, %v521
      %v523 = vsel %vm491, %v429, 0.0
      %v524 = vadd.f32 %v522, %v523
      %v525 = vsel %vm491, %v432, 0.0
      %v526 = vadd.f32 %v524, %v525
      %v527 = vsel %vm491, %v437, 0.0
      %v528 = vadd.f32 %v526, %v527
      %v529 = vsel %vm491, %v440, 0.0
      %v530 = vadd.f32 %v528, %v529
      %v531 = vsel %vm491, %v445, 0.0
      %v532 = vadd.f32 %v530, %v531
      %v533 = vsel %vm491, %v448, 0.0
      %v534 = vadd.f32 %v532, %v533
      %v535 = vsel %vm491, %v453, 0.0
      %v536 = vadd.f32 %v534, %v535
      %v537 = vsel %vm491, %v456, 0.0
      %v538 = vadd.f32 %v536, %v537
      %v539 = vsel %vm491, %v461, 0.0
      %v540 = vadd.f32 %v538, %v539
      %v541 = vsel %vm491, %v464, 0.0
      %v542 = vadd.f32 %v540, %v541
      %v543 = vsel %vm491, %v469, 0.0
      %v544 = vadd.f32 %v542, %v543
      %v545 = vsel %vm491, %v472, 0.0
      %v546 = vadd.f32 %v544, %v545
      %v547 = vsel %vm491, %v477, 0.0
      %v548 = vadd.f32 %v546, %v547
      %v549 = vsel %vm491, %v480, 0.0
      %v550 = vadd.f32 %v548, %v549
      %v551 = vsel %vm491, %v485, 0.0
      %v552 = vadd.f32 %v550, %v551
      %v553 = vsel %vm491, %v488, 0.0
      %v554 = vadd.f32 %v552, %v553
      %v555 = vrot.slane %v554, 4
      %v556 = vadd.f32 %v554, %v555
      %v557 = vrot.slane %v556, 2
      %v558 = vadd.f32 %v556, %v557
      %v559 = vrot.slane %v558, 1
      %v560 = vadd.f32 %v558, %v559
      %v561 = vmul.f32 %v365, %v365
      %v562 = vmul.f32 %v368, %v368
      %v563 = vmul.f32 %v373, %v373
      %v564 = vmul.f32 %v376, %v376
      %v565 = vmul.f32 %v381, %v381
      %v566 = vmul.f32 %v384, %v384
      %v567 = vmul.f32 %v389, %v389
      %v568 = vmul.f32 %v392, %v392
      %v569 = vmul.f32 %v397, %v397
      %v570 = vmul.f32 %v400, %v400
      %v571 = vmul.f32 %v405, %v405
      %v572 = vmul.f32 %v408, %v408
      %v573 = vmul.f32 %v413, %v413
      %v574 = vmul.f32 %v416, %v416
      %v575 = vmul.f32 %v421, %v421
      %v576 = vmul.f32 %v424, %v424
      %v577 = vmul.f32 %v429, %v429
      %v578 = vmul.f32 %v432, %v432
      %v579 = vmul.f32 %v437, %v437
      %v580 = vmul.f32 %v440, %v440
      %v581 = vmul.f32 %v445, %v445
      %v582 = vmul.f32 %v448, %v448
      %v583 = vmul.f32 %v453, %v453
      %v584 = vmul.f32 %v456, %v456
      %v585 = vmul.f32 %v461, %v461
      %v586 = vmul.f32 %v464, %v464
      %v587 = vmul.f32 %v469, %v469
      %v588 = vmul.f32 %v472, %v472
      %v589 = vmul.f32 %v477, %v477
      %v590 = vmul.f32 %v480, %v480
      %v591 = vmul.f32 %v485, %v485
      %v592 = vmul.f32 %v488, %v488
      %v593 = vsel %vm491, %v561, 0.0
      %v594 = vsel %vm491, %v562, 0.0
      %v595 = vadd.f32 %v593, %v594
      %v596 = vsel %vm491, %v563, 0.0
      %v597 = vadd.f32 %v595, %v596
      %v598 = vsel %vm491, %v564, 0.0
      %v599 = vadd.f32 %v597, %v598
      %v600 = vsel %vm491, %v565, 0.0
      %v601 = vadd.f32 %v599, %v600
      %v602 = vsel %vm491, %v566, 0.0
      %v603 = vadd.f32 %v601, %v602
      %v604 = vsel %vm491, %v567, 0.0
      %v605 = vadd.f32 %v603, %v604
      %v606 = vsel %vm491, %v568, 0.0
      %v607 = vadd.f32 %v605, %v606
      %v608 = vsel %vm491, %v569, 0.0
      %v609 = vadd.f32 %v607, %v608
      %v610 = vsel %vm491, %v570, 0.0
      %v611 = vadd.f32 %v609, %v610
      %v612 = vsel %vm491, %v571, 0.0
      %v613 = vadd.f32 %v611, %v612
      %v614 = vsel %vm491, %v572, 0.0
      %v615 = vadd.f32 %v613, %v614
      %v616 = vsel %vm491, %v573, 0.0
      %v617 = vadd.f32 %v615, %v616
      %v618 = vsel %vm491, %v574, 0.0
      %v619 = vadd.f32 %v617, %v618
      %v620 = vsel %vm491, %v575, 0.0
      %v621 = vadd.f32 %v619, %v620
      %v622 = vsel %vm491, %v576, 0.0
      %v623 = vadd.f32 %v621, %v622
      %v624 = vsel %vm491, %v577, 0.0
      %v625 = vadd.f32 %v623, %v624
      %v626 = vsel %vm491, %v578, 0.0
      %v627 = vadd.f32 %v625, %v626
      %v628 = vsel %vm491, %v579, 0.0
      %v629 = vadd.f32 %v627, %v628
      %v630 = vsel %vm491, %v580, 0.0
      %v631 = vadd.f32 %v629, %v630
      %v632 = vsel %vm491, %v581, 0.0
      %v633 = vadd.f32 %v631, %v632
      %v634 = vsel %vm491, %v582, 0.0
      %v635 = vadd.f32 %v633, %v634
      %v636 = vsel %vm491, %v583, 0.0
      %v637 = vadd.f32 %v635, %v636
      %v638 = vsel %vm491, %v584, 0.0
      %v639 = vadd.f32 %v637, %v638
      %v640 = vsel %vm491, %v585, 0.0
      %v641 = vadd.f32 %v639, %v640
      %v642 = vsel %vm491, %v586, 0.0
      %v643 = vadd.f32 %v641, %v642
      %v644 = vsel %vm491, %v587, 0.0
      %v645 = vadd.f32 %v643, %v644
      %v646 = vsel %vm491, %v588, 0.0
      %v647 = vadd.f32 %v645, %v646
      %v648 = vsel %vm491, %v589, 0.0
      %v649 = vadd.f32 %v647, %v648
      %v650 = vsel %vm491, %v590, 0.0
      %v651 = vadd.f32 %v649, %v650
      %v652 = vsel %vm491, %v591, 0.0
      %v653 = vadd.f32 %v651, %v652
      %v654 = vsel %vm491, %v592, 0.0
      %v655 = vadd.f32 %v653, %v654
      %v656 = vrot.slane %v655, 4
      %v657 = vadd.f32 %v655, %v656
      %v658 = vrot.slane %v657, 2
      %v659 = vadd.f32 %v657, %v658
      %v660 = vrot.slane %v659, 1
      %v661 = vadd.f32 %v659, %v660
      %vm662 = vcmask 1040384
      %v663 = vsel %vm662, %v560, %v661
      %s664 = scalar_lea.vmem %s1, 20
      %v665 = vld [vmem:[%s664] sm:$0xf]
      %v666 = vld [vmem:[%s664 + $0x4] sm:$0xf]
      %v667 = vld [vmem:[%s664 + $0x8] sm:$0xf]
      %v668 = vld [vmem:[%s664 + $0xc] sm:$0xf]
      %v669 = vld [vmem:[%s664 + $0x10] sm:$0x3]
      %v675 = vunpack.c.l.b16 %v665
      %v676 = vunpack.c.l.b16 %v666
      %v677 = vunpack.c.l.b16 %v667
      %v678 = vunpack.c.l.b16 %v668
      %v679 = vunpack.c.l.b16 %v669
      %v680 = vpack.c.b16 %v676, %v675
      %v681 = vpack.c.b16 %v678, %v677
      %v682 = vpack.c.b16 %v679, %v679
      %v686 = vsel %vm326, %v682, 0
      %688 = vmatprep.subr.bf16.mxu0 0
      %689 = vmatpush1.bf16.msra.mxu0 %v680
      %690 = vmatprep.subr.bf16.mxu0 0
      %691 = vmatpush1.bf16.msra.mxu0 %v681
      %692 = vmatprep.subr.bf16.mxu0 0
      %693 = vmatpush1.bf16.msra.mxu0 %v686
      %694 = vmatprep.subr.bf16.mxu0 0
      %695 = vmatpush1.bf16.msra.mxu0 0
      %696 = vmatprep.subr.bf16.mxu0 0
      %697 = vmatpush1.bf16.msra.mxu0 0
      %698 = vmatprep.subr.bf16.mxu0 0
      %699 = vmatpush1.bf16.msra.mxu0 0
      %700 = vmatprep.subr.bf16.mxu0 0
      %701 = vmatpush1.bf16.msra.mxu0 0
      %702 = vmatprep.subr.bf16.mxu0 0
      %703 = vmatpush1.bf16.msra.mxu0 0
      %704 = vmatprep.subr.bf16.mxu0 0
      %705 = vmatpush1.bf16.msra.mxu0 0
      %706 = vmatprep.subr.bf16.mxu0 0
      %707 = vmatpush1.bf16.msra.mxu0 0
      %708 = vmatprep.subr.bf16.mxu0 0
      %709 = vmatpush1.bf16.msra.mxu0 0
      %710 = vmatprep.subr.bf16.mxu0 0
      %711 = vmatpush1.bf16.msra.mxu0 0
      %712 = vmatprep.subr.bf16.mxu0 0
      %713 = vmatpush1.bf16.msra.mxu0 0
      %714 = vmatprep.subr.bf16.mxu0 0
      %715 = vmatpush1.bf16.msra.mxu0 0
      %716 = vmatprep.subr.bf16.mxu0 0
      %717 = vmatpush1.bf16.msra.mxu0 0
      %718 = vmatprep.subr.bf16.mxu0 0
      %719 = vmatpush1.bf16.msra.mxu0 0
      %720 = vmatprep.mubr.bf16.mxu0 0
      %721 = vmatmul.mubr.bf16.gmra.mrb[0].mxu0 %v279
      %v722 = vpop.f32.mrb[0].mxu0
      %v723 = vadd.f32 0.0, %v722
      %v724 = vpop.f32.mrb[0].mxu0
      %v725 = vpop.f32.mrb[0].mxu0
      %v726 = vadd.f32 0.0, %v725
      %v727 = vpop.f32.mrb[0].mxu0
      %728 = vmatprep.mubr.bf16.mxu0 0
      %729 = vmatmul.mubr.bf16.gmra.mrb[0].mxu0 %v282
      %v730 = vpop.f32.mrb[0].mxu0
      %v731 = vadd.f32 0.0, %v730
      %v732 = vpop.f32.mrb[0].mxu0
      %v733 = vpop.f32.mrb[0].mxu0
      %v734 = vadd.f32 0.0, %v733
      %v735 = vpop.f32.mrb[0].mxu0
      %736 = vmatprep.mubr.bf16.mxu0 0
      %737 = vmatmul.mubr.bf16.gmra.mrb[0].mxu0 %v285
      %v738 = vpop.f32.mrb[0].mxu0
      %v739 = vadd.f32 0.0, %v738
      %v740 = vpop.f32.mrb[0].mxu0
      %v741 = vpop.f32.mrb[0].mxu0
      %v742 = vadd.f32 0.0, %v741
      %v743 = vpop.f32.mrb[0].mxu0
      %744 = vmatprep.mubr.bf16.mxu0 0
      %745 = vmatmul.mubr.bf16.gmra.mrb[0].mxu0 %v288
      %v746 = vpop.f32.mrb[0].mxu0
      %v747 = vadd.f32 0.0, %v746
      %v748 = vpop.f32.mrb[0].mxu0
      %v749 = vpop.f32.mrb[0].mxu0
      %v750 = vadd.f32 0.0, %v749
      %v751 = vpop.f32.mrb[0].mxu0
      %752 = vmatprep.mubr.bf16.mxu0 0
      %753 = vmatmul.mubr.bf16.gmra.mrb[0].mxu0 %v291
      %v754 = vpop.f32.mrb[0].mxu0
      %v755 = vadd.f32 0.0, %v754
      %v756 = vpop.f32.mrb[0].mxu0
      %v757 = vpop.f32.mrb[0].mxu0
      %v758 = vadd.f32 0.0, %v757
      %v759 = vpop.f32.mrb[0].mxu0
      %760 = vmatprep.mubr.bf16.mxu0 0
      %761 = vmatmul.mubr.bf16.gmra.mrb[0].mxu0 %v294
      %v762 = vpop.f32.mrb[0].mxu0
      %v763 = vadd.f32 0.0, %v762
      %v764 = vpop.f32.mrb[0].mxu0
      %v765 = vpop.f32.mrb[0].mxu0
      %v766 = vadd.f32 0.0, %v765
      %v767 = vpop.f32.mrb[0].mxu0
      %768 = vmatprep.mubr.bf16.mxu0 0
      %769 = vmatmul.mubr.bf16.gmra.mrb[0].mxu0 %v297
      %v770 = vpop.f32.mrb[0].mxu0
      %v771 = vadd.f32 0.0, %v770
      %v772 = vpop.f32.mrb[0].mxu0
      %v773 = vpop.f32.mrb[0].mxu0
      %v774 = vadd.f32 0.0, %v773
      %v775 = vpop.f32.mrb[0].mxu0
      %776 = vmatprep.mubr.bf16.mxu0 0
      %777 = vmatmul.mubr.bf16.gmra.mrb[0].mxu0 %v300
      %v778 = vpop.f32.mrb[0].mxu0
      %v779 = vadd.f32 0.0, %v778
      %v780 = vpop.f32.mrb[0].mxu0
      %v781 = vpop.f32.mrb[0].mxu0
      %v782 = vadd.f32 0.0, %v781
      %v783 = vpop.f32.mrb[0].mxu0
      %784 = vmatprep.mubr.bf16.mxu0 0
      %785 = vmatmul.mubr.bf16.gmra.mrb[0].mxu0 %v303
      %v786 = vpop.f32.mrb[0].mxu0
      %v787 = vadd.f32 0.0, %v786
      %v788 = vpop.f32.mrb[0].mxu0
      %v789 = vpop.f32.mrb[0].mxu0
      %v790 = vadd.f32 0.0, %v789
      %v791 = vpop.f32.mrb[0].mxu0
      %792 = vmatprep.mubr.bf16.mxu0 0
      %793 = vmatmul.mubr.bf16.gmra.mrb[0].mxu0 %v306
      %v794 = vpop.f32.mrb[0].mxu0
      %v795 = vadd.f32 0.0, %v794
      %v796 = vpop.f32.mrb[0].mxu0
      %v797 = vpop.f32.mrb[0].mxu0
      %v798 = vadd.f32 0.0, %v797
      %v799 = vpop.f32.mrb[0].mxu0
      %800 = vmatprep.mubr.bf16.mxu0 0
      %801 = vmatmul.mubr.bf16.gmra.mrb[0].mxu0 %v309
      %v802 = vpop.f32.mrb[0].mxu0
      %v803 = vadd.f32 0.0, %v802
      %v804 = vpop.f32.mrb[0].mxu0
      %v805 = vpop.f32.mrb[0].mxu0
      %v806 = vadd.f32 0.0, %v805
      %v807 = vpop.f32.mrb[0].mxu0
      %808 = vmatprep.mubr.bf16.mxu0 0
      %809 = vmatmul.mubr.bf16.gmra.mrb[0].mxu0 %v312
      %v810 = vpop.f32.mrb[0].mxu0
      %v811 = vadd.f32 0.0, %v810
      %v812 = vpop.f32.mrb[0].mxu0
      %v813 = vpop.f32.mrb[0].mxu0
      %v814 = vadd.f32 0.0, %v813
      %v815 = vpop.f32.mrb[0].mxu0
      %816 = vmatprep.mubr.bf16.mxu0 0
      %817 = vmatmul.mubr.bf16.gmra.mrb[0].mxu0 %v315
      %v818 = vpop.f32.mrb[0].mxu0
      %v819 = vadd.f32 0.0, %v818
      %v820 = vpop.f32.mrb[0].mxu0
      %v821 = vpop.f32.mrb[0].mxu0
      %v822 = vadd.f32 0.0, %v821
      %v823 = vpop.f32.mrb[0].mxu0
      %824 = vmatprep.mubr.bf16.mxu0 0
      %825 = vmatmul.mubr.bf16.gmra.mrb[0].mxu0 %v318
      %v826 = vpop.f32.mrb[0].mxu0
      %v827 = vadd.f32 0.0, %v826
      %v828 = vpop.f32.mrb[0].mxu0
      %v829 = vpop.f32.mrb[0].mxu0
      %v830 = vadd.f32 0.0, %v829
      %v831 = vpop.f32.mrb[0].mxu0
      %832 = vmatprep.mubr.bf16.mxu0 0
      %833 = vmatmul.mubr.bf16.gmra.mrb[0].mxu0 %v321
      %v834 = vpop.f32.mrb[0].mxu0
      %v835 = vadd.f32 0.0, %v834
      %v836 = vpop.f32.mrb[0].mxu0
      %v837 = vpop.f32.mrb[0].mxu0
      %v838 = vadd.f32 0.0, %v837
      %v839 = vpop.f32.mrb[0].mxu0
      %840 = vmatprep.mubr.bf16.mxu0 0
      %841 = vmatmul.mubr.bf16.gmra.mrb[0].mxu0 %v324
      %v842 = vpop.f32.mrb[0].mxu0
      %v843 = vadd.f32 0.0, %v842
      %v844 = vpop.f32.mrb[0].mxu0
      %v845 = vpop.f32.mrb[0].mxu0
      %v846 = vadd.f32 0.0, %v845
      %v847 = vpop.f32.mrb[0].mxu0
      %848 = vdwg.mxu0
      %v849 = vsel %vm491, %v723, 0.0
      %v850 = vsel %vm491, %v726, 0.0
      %v851 = vadd.f32 %v849, %v850
      %v852 = vsel %vm491, %v731, 0.0
      %v853 = vadd.f32 %v851, %v852
      %v854 = vsel %vm491, %v734, 0.0
      %v855 = vadd.f32 %v853, %v854
      %v856 = vsel %vm491, %v739, 0.0
      %v857 = vadd.f32 %v855, %v856
      %v858 = vsel %vm491, %v742, 0.0
      %v859 = vadd.f32 %v857, %v858
      %v860 = vsel %vm491, %v747, 0.0
      %v861 = vadd.f32 %v859, %v860
      %v862 = vsel %vm491, %v750, 0.0
      %v863 = vadd.f32 %v861, %v862
      %v864 = vsel %vm491, %v755, 0.0
      %v865 = vadd.f32 %v863, %v864
      %v866 = vsel %vm491, %v758, 0.0
      %v867 = vadd.f32 %v865, %v866
      %v868 = vsel %vm491, %v763, 0.0
      %v869 = vadd.f32 %v867, %v868
      %v870 = vsel %vm491, %v766, 0.0
      %v871 = vadd.f32 %v869, %v870
      %v872 = vsel %vm491, %v771, 0.0
      %v873 = vadd.f32 %v871, %v872
      %v874 = vsel %vm491, %v774, 0.0
      %v875 = vadd.f32 %v873, %v874
      %v876 = vsel %vm491, %v779, 0.0
      %v877 = vadd.f32 %v875, %v876
      %v878 = vsel %vm491, %v782, 0.0
      %v879 = vadd.f32 %v877, %v878
      %v880 = vsel %vm491, %v787, 0.0
      %v881 = vadd.f32 %v879, %v880
      %v882 = vsel %vm491, %v790, 0.0
      %v883 = vadd.f32 %v881, %v882
      %v884 = vsel %vm491, %v795, 0.0
      %v885 = vadd.f32 %v883, %v884
      %v886 = vsel %vm491, %v798, 0.0
      %v887 = vadd.f32 %v885, %v886
      %v888 = vsel %vm491, %v803, 0.0
      %v889 = vadd.f32 %v887, %v888
      %v890 = vsel %vm491, %v806, 0.0
      %v891 = vadd.f32 %v889, %v890
      %v892 = vsel %vm491, %v811, 0.0
      %v893 = vadd.f32 %v891, %v892
      %v894 = vsel %vm491, %v814, 0.0
      %v895 = vadd.f32 %v893, %v894
      %v896 = vsel %vm491, %v819, 0.0
      %v897 = vadd.f32 %v895, %v896
      %v898 = vsel %vm491, %v822, 0.0
      %v899 = vadd.f32 %v897, %v898
      %v900 = vsel %vm491, %v827, 0.0
      %v901 = vadd.f32 %v899, %v900
      %v902 = vsel %vm491, %v830, 0.0
      %v903 = vadd.f32 %v901, %v902
      %v904 = vsel %vm491, %v835, 0.0
      %v905 = vadd.f32 %v903, %v904
      %v906 = vsel %vm491, %v838, 0.0
      %v907 = vadd.f32 %v905, %v906
      %v908 = vsel %vm491, %v843, 0.0
      %v909 = vadd.f32 %v907, %v908
      %v910 = vsel %vm491, %v846, 0.0
      %v911 = vadd.f32 %v909, %v910
      %v912 = vrot.slane %v911, 4
      %v913 = vadd.f32 %v911, %v912
      %v914 = vrot.slane %v913, 2
      %v915 = vadd.f32 %v913, %v914
      %v916 = vrot.slane %v915, 1
      %v917 = vadd.f32 %v915, %v916
      %v918 = vmul.f32 %v723, %v723
      %v919 = vmul.f32 %v726, %v726
      %v920 = vmul.f32 %v731, %v731
      %v921 = vmul.f32 %v734, %v734
      %v922 = vmul.f32 %v739, %v739
      %v923 = vmul.f32 %v742, %v742
      %v924 = vmul.f32 %v747, %v747
      %v925 = vmul.f32 %v750, %v750
      %v926 = vmul.f32 %v755, %v755
      %v927 = vmul.f32 %v758, %v758
      %v928 = vmul.f32 %v763, %v763
      %v929 = vmul.f32 %v766, %v766
      %v930 = vmul.f32 %v771, %v771
      %v931 = vmul.f32 %v774, %v774
      %v932 = vmul.f32 %v779, %v779
      %v933 = vmul.f32 %v782, %v782
      %v934 = vmul.f32 %v787, %v787
      %v935 = vmul.f32 %v790, %v790
      %v936 = vmul.f32 %v795, %v795
      %v937 = vmul.f32 %v798, %v798
      %v938 = vmul.f32 %v803, %v803
      %v939 = vmul.f32 %v806, %v806
      %v940 = vmul.f32 %v811, %v811
      %v941 = vmul.f32 %v814, %v814
      %v942 = vmul.f32 %v819, %v819
      %v943 = vmul.f32 %v822, %v822
      %v944 = vmul.f32 %v827, %v827
      %v945 = vmul.f32 %v830, %v830
      %v946 = vmul.f32 %v835, %v835
      %v947 = vmul.f32 %v838, %v838
      %v948 = vmul.f32 %v843, %v843
      %v949 = vmul.f32 %v846, %v846
      %v950 = vsel %vm491, %v918, 0.0
      %v951 = vsel %vm491, %v919, 0.0
      %v952 = vadd.f32 %v950, %v951
      %v953 = vsel %vm491, %v920, 0.0
      %v954 = vadd.f32 %v952, %v953
      %v955 = vsel %vm491, %v921, 0.0
      %v956 = vadd.f32 %v954, %v955
      %v957 = vsel %vm491, %v922, 0.0
      %v958 = vadd.f32 %v956, %v957
      %v959 = vsel %vm491, %v923, 0.0
      %v960 = vadd.f32 %v958, %v959
      %v961 = vsel %vm491, %v924, 0.0
      %v962 = vadd.f32 %v960, %v961
      %v963 = vsel %vm491, %v925, 0.0
      %v964 = vadd.f32 %v962, %v963
      %v965 = vsel %vm491, %v926, 0.0
      %v966 = vadd.f32 %v964, %v965
      %v967 = vsel %vm491, %v927, 0.0
      %v968 = vadd.f32 %v966, %v967
      %v969 = vsel %vm491, %v928, 0.0
      %v970 = vadd.f32 %v968, %v969
      %v971 = vsel %vm491, %v929, 0.0
      %v972 = vadd.f32 %v970, %v971
      %v973 = vsel %vm491, %v930, 0.0
      %v974 = vadd.f32 %v972, %v973
      %v975 = vsel %vm491, %v931, 0.0
      %v976 = vadd.f32 %v974, %v975
      %v977 = vsel %vm491, %v932, 0.0
      %v978 = vadd.f32 %v976, %v977
      %v979 = vsel %vm491, %v933, 0.0
      %v980 = vadd.f32 %v978, %v979
      %v981 = vsel %vm491, %v934, 0.0
      %v982 = vadd.f32 %v980, %v981
      %v983 = vsel %vm491, %v935, 0.0
      %v984 = vadd.f32 %v982, %v983
      %v985 = vsel %vm491, %v936, 0.0
      %v986 = vadd.f32 %v984, %v985
      %v987 = vsel %vm491, %v937, 0.0
      %v988 = vadd.f32 %v986, %v987
      %v989 = vsel %vm491, %v938, 0.0
      %v990 = vadd.f32 %v988, %v989
      %v991 = vsel %vm491, %v939, 0.0
      %v992 = vadd.f32 %v990, %v991
      %v993 = vsel %vm491, %v940, 0.0
      %v994 = vadd.f32 %v992, %v993
      %v995 = vsel %vm491, %v941, 0.0
      %v996 = vadd.f32 %v994, %v995
      %v997 = vsel %vm491, %v942, 0.0
      %v998 = vadd.f32 %v996, %v997
      %v999 = vsel %vm491, %v943, 0.0
      %v1000 = vadd.f32 %v998, %v999
      %v1001 = vsel %vm491, %v944, 0.0
      %v1002 = vadd.f32 %v1000, %v1001
      %v1003 = vsel %vm491, %v945, 0.0
      %v1004 = vadd.f32 %v1002, %v1003
      %v1005 = vsel %vm491, %v946, 0.0
      %v1006 = vadd.f32 %v1004, %v1005
      %v1007 = vsel %vm491, %v947, 0.0
      %v1008 = vadd.f32 %v1006, %v1007
      %v1009 = vsel %vm491, %v948, 0.0
      %v1010 = vadd.f32 %v1008, %v1009
      %v1011 = vsel %vm491, %v949, 0.0
      %v1012 = vadd.f32 %v1010, %v1011
      %v1013 = vrot.slane %v1012, 4
      %v1014 = vadd.f32 %v1012, %v1013
      %v1015 = vrot.slane %v1014, 2
      %v1016 = vadd.f32 %v1014, %v1015
      %v1017 = vrot.slane %v1016, 1
      %v1018 = vadd.f32 %v1016, %v1017
      %v1019 = vsel %vm662, %v917, %v1018
      %v1020 = vadd.f32 %v663, %v1019
      %vm1021 = vcmask 123904
      %1022 = vst.msk [vmem:[%s143] sm:$0x3] %vm1021, %v1020
      %p1023 = scmp.lt.s32.totalorder %s13, 1
      %s1024 = scalar_select %p1023, %s13, 1
      %s1025 = smul.addr %s1024, 2
      %s1026 = scalar_lea.vmem %s2, %s1025
      // Predicated region
      $region29: #{dc_up_block.2} parent=27 // pred_check
        %p1027 = pneg %p78
      $region30: #{dc_up_block.2} parent=27 // pred_check_branch
        %1029 = sbr.rel (%p1027) target = $region32
      $region31: #{dc_up_block.2} parent=27 // pred_region
        _
      $region32: #{dc_up_block.2} parent=27 // pred_fallthru
        _
    $region28: #{dc_up_block.2} parent=5 // pred_fallthru
      _
    %p1030 = scmp.le.s32.totalorder 2, %s8
    // Predicated region
    $region33: #{dc_up_block.2} parent=5 // pred_check
      %p1031 = pneg %p1030
    $region34: #{dc_up_block.2} parent=5 // pred_check_branch
      %1033 = sbr.rel (%p1031) target = $region36
    $region35: #{dc_up_block.2} parent=5 // pred_region
      %s1034 = ssub.s32 %s8, 2
      // Predicated region
      $region37: #{dc_up_block.2} parent=35 // pred_check
        %p1035 = pneg %p84
      $region38: #{dc_up_block.2} parent=35 // pred_check_branch
        %1037 = sbr.rel (%p1035) target = $region40
      $region39: #{dc_up_block.2} parent=35 // pred_region
        %p1038 = scmp.lt.s32.totalorder %s14, 1
        %s1039 = scalar_select %p1038, %s14, 1
        %s1040 = smul.addr %s1039, 2
        %s1041 = scalar_lea.vmem %s2, %s1040
      $region40: #{dc_up_block.2} parent=35 // pred_fallthru
        _
    $region36: #{dc_up_block.2} parent=5 // pred_fallthru
      _
  $region6: #{dc_up_block.2} parent=0 // loop_footer
    %s12 = sadd.s32 1, %s8
  $region7: #{dc_up_block.2} parent=0 // loop_footer_branch
    %7 = sbr.rel target = $region3
  $region8: #{dc_up_block.2} parent=0 // loop_exit
    _

// kernel: dc_up_block.3
$region0: #{dc_up_block.3}
  #allocation0 [shape = 'u32[]', space=smem, size = 0x4, offset = 0x4, fixed_abs, tag = 'smem constant byte address 0x4 - core index']
  #allocation1 [shape = 'u32[144,128]{1,0:T(1,128)}', space=vmem, size = 0x12000, scoped, tag = 'internal scratch']
  %s0 = inlined_call_operand.vmem [shape: bf16[512,36], index: 0, kind: input, shape index: {}]
  %s1 = inlined_call_operand.vmem [shape: bf16[2,36,16], index: 1, kind: input, shape index: {}]
  %s2 = inlined_call_operand.vmem [shape: f32[1,16], index: 2, kind: input, shape index: {}]
  %s3 = inlined_call_operand.vmem [shape: f32[1,16], index: 3, kind: input, shape index: {}]
  %s4 = inlined_call_operand.vmem [shape: f32[32,2,16,16], index: 4, kind: output, shape index: {}]
  %s5 = sld [smem:[#allocation0]]
  $region49: #{dc_up_block.3} parent=0
    _
  %s7 = ssub.s32 1, %s5
  %s8 = scalar_select 0, %s7, %s5
  loop: start=0, step=1, limit=4
  $region2: #{dc_up_block.3} parent=0 // loop_pre_header
    _
  $region3: #{dc_up_block.3} parent=0 // loop_header
    %s10 = sphi 0, %s14
    %p11 = scmp.ge.s32.totalorder %s10, 4
    %s20 = sphi 0, %s22
    %s23 = sphi 0, %s20
    %s24 = sphi 0, %s23
    %s40 = sphi 0, %s24
    %s44 = sphi 0, %s44
    %s46 = sphi 0, %s44
    %s47 = sphi 0, %s46
    %s61 = sphi 0, %s47
    %s65 = sphi 0, %s65
    %s67 = sphi 0, %s65
    %s68 = sphi 0, %s67
    %s82 = sphi 0, %s68
    %s86 = sphi 0, %s86
    %s88 = sphi 0, %s86
    %s89 = sphi 0, %s88
    %s103 = sphi 0, %s89
    %s109 = sphi 0, %s111
    %s112 = sphi 0, %s109
    %s113 = sphi 0, %s112
    %s129 = sphi 0, %s113
  $region4: #{dc_up_block.3} parent=0 // loop_header_branch
    %13 = sbr.rel (%p11) target = $region8
  $region5: #{dc_up_block.3} parent=0 // loop_body
    %s15 = ssub.s32 %s10, 1
    %s16 = ssub.s32 %s10, 2
    %s17 = sadd.s32 %s10, 1
    %s18 = ssub.s32 %s10, %s17
    %p19 = scmp.eq.s32.totalorder %s18, 0
    %s21 = sadd.s32 %s20, 1
    %s22 = scalar_select %p19, %s20, %s21
    %p25 = pneg %p19
    %p26 = scmp.eq.s32.totalorder %s10, 1
    %p27 = por %p25, %p26
    %p28 = scmp.ne.s32.totalorder %s20, %s23
    %p29 = scmp.eq.s32.totalorder %s10, 0
    %p30 = por %p28, %p29
    %p31 = scmp.ne.s32.totalorder %s20, %s23
    %p32 = scmp.eq.s32.totalorder %s15, 1
    %p33 = por %p31, %p32
    %p34 = scmp.ne.s32.totalorder %s23, %s24
    %p35 = scmp.eq.s32.totalorder %s15, 0
    %p36 = por %p34, %p35
    %p37 = scmp.ne.s32.totalorder %s23, %s24
    %p38 = scmp.eq.s32.totalorder %s16, 1
    %p39 = por %p37, %p38
    %p41 = scmp.ne.s32.totalorder %s24, %s40
    %p42 = scmp.eq.s32.totalorder %s16, 0
    %p43 = por %p41, %p42
    %s45 = sadd.s32 %s44, 1
    %p48 = scmp.eq.s32.totalorder %s10, 1
    %p49 = scmp.ne.s32.totalorder %s44, %s46
    %p50 = scmp.eq.s32.totalorder %s10, 0
    %p51 = por %p49, %p50
    %p52 = scmp.ne.s32.totalorder %s44, %s46
    %p53 = scmp.eq.s32.totalorder %s15, 1
    %p54 = por %p52, %p53
    %p55 = scmp.ne.s32.totalorder %s46, %s47
    %p56 = scmp.eq.s32.totalorder %s15, 0
    %p57 = por %p55, %p56
    %p58 = scmp.ne.s32.totalorder %s46, %s47
    %p59 = scmp.eq.s32.totalorder %s16, 1
    %p60 = por %p58, %p59
    %p62 = scmp.ne.s32.totalorder %s47, %s61
    %p63 = scmp.eq.s32.totalorder %s16, 0
    %p64 = por %p62, %p63
    %s66 = sadd.s32 %s65, 1
    %p69 = scmp.eq.s32.totalorder %s10, 1
    %p70 = scmp.ne.s32.totalorder %s65, %s67
    %p71 = scmp.eq.s32.totalorder %s10, 0
    %p72 = por %p70, %p71
    %p73 = scmp.ne.s32.totalorder %s65, %s67
    %p74 = scmp.eq.s32.totalorder %s15, 1
    %p75 = por %p73, %p74
    %p76 = scmp.ne.s32.totalorder %s67, %s68
    %p77 = scmp.eq.s32.totalorder %s15, 0
    %p78 = por %p76, %p77
    %p79 = scmp.ne.s32.totalorder %s67, %s68
    %p80 = scmp.eq.s32.totalorder %s16, 1
    %p81 = por %p79, %p80
    %p83 = scmp.ne.s32.totalorder %s68, %s82
    %p84 = scmp.eq.s32.totalorder %s16, 0
    %p85 = por %p83, %p84
    %s87 = sadd.s32 %s86, 1
    %p90 = scmp.eq.s32.totalorder %s10, 1
    %p91 = scmp.ne.s32.totalorder %s86, %s88
    %p92 = scmp.eq.s32.totalorder %s10, 0
    %p93 = por %p91, %p92
    %p94 = scmp.ne.s32.totalorder %s86, %s88
    %p95 = scmp.eq.s32.totalorder %s15, 1
    %p96 = por %p94, %p95
    %p97 = scmp.ne.s32.totalorder %s88, %s89
    %p98 = scmp.eq.s32.totalorder %s15, 0
    %p99 = por %p97, %p98
    %p100 = scmp.ne.s32.totalorder %s88, %s89
    %p101 = scmp.eq.s32.totalorder %s16, 1
    %p102 = por %p100, %p101
    %p104 = scmp.ne.s32.totalorder %s89, %s103
    %p105 = scmp.eq.s32.totalorder %s16, 0
    %p106 = por %p104, %p105
    %s107 = ssub.s32 %s10, %s17
    %p108 = scmp.eq.s32.totalorder %s107, 0
    %s110 = sadd.s32 %s109, 1
    %s111 = scalar_select %p108, %s109, %s110
    %p114 = pneg %p108
    %p115 = scmp.eq.s32.totalorder %s10, 1
    %p116 = por %p114, %p115
    %p117 = scmp.ne.s32.totalorder %s109, %s112
    %p118 = scmp.eq.s32.totalorder %s10, 0
    %p119 = por %p117, %p118
    %p120 = scmp.ne.s32.totalorder %s109, %s112
    %p121 = scmp.eq.s32.totalorder %s15, 1
    %p122 = por %p120, %p121
    %p123 = scmp.ne.s32.totalorder %s112, %s113
    %p124 = scmp.eq.s32.totalorder %s15, 0
    %p125 = por %p123, %p124
    %p126 = scmp.ne.s32.totalorder %s112, %s113
    %p127 = scmp.eq.s32.totalorder %s16, 1
    %p128 = por %p126, %p127
    %p130 = scmp.ne.s32.totalorder %s113, %s129
    %p131 = scmp.eq.s32.totalorder %s16, 0
    %p132 = por %p130, %p131
    %p133 = scmp.le.s32.totalorder 1, %s10
    %p134 = scmp.lt.s32.totalorder %s10, 3
    %p135 = pnand %p133, %p134
    %p136 = pneg %p135
    // Predicated region
    $region9: #{dc_up_block.3} parent=5 // pred_check
      _
    $region10: #{dc_up_block.3} parent=5 // pred_check_branch
      %138 = sbr.rel (%p135) target = $region12
    $region11: #{dc_up_block.3} parent=5 // pred_region
      %s139 = ssub.s32 %s10, 1
      // Predicated region
      $region13: #{dc_up_block.3} parent=11 // pred_check
        %p140 = pneg %p57
      $region14: #{dc_up_block.3} parent=11 // pred_check_branch
        %142 = sbr.rel (%p140) target = $region16
      $region15: #{dc_up_block.3} parent=11 // pred_region
        _
      $region16: #{dc_up_block.3} parent=11 // pred_fallthru
        _
      // Predicated region
      $region17: #{dc_up_block.3} parent=11 // pred_check
        %p143 = pneg %p78
      $region18: #{dc_up_block.3} parent=11 // pred_check_branch
        %145 = sbr.rel (%p143) target = $region20
      $region19: #{dc_up_block.3} parent=11 // pred_region
        _
      $region20: #{dc_up_block.3} parent=11 // pred_fallthru
        _
      // Predicated region
      $region21: #{dc_up_block.3} parent=11 // pred_check
        %p146 = pneg %p99
      $region22: #{dc_up_block.3} parent=11 // pred_check_branch
        %148 = sbr.rel (%p146) target = $region24
      $region23: #{dc_up_block.3} parent=11 // pred_region
        _
      $region24: #{dc_up_block.3} parent=11 // pred_fallthru
        _
    $region12: #{dc_up_block.3} parent=5 // pred_fallthru
      _
    %p149 = scmp.lt.s32.totalorder %s10, 2
    // Predicated region
    $region25: #{dc_up_block.3} parent=5 // pred_check
      %p150 = pneg %p149
    $region26: #{dc_up_block.3} parent=5 // pred_check_branch
      %152 = sbr.rel (%p150) target = $region28
    $region27: #{dc_up_block.3} parent=5 // pred_region
      // Predicated region
      $region29: #{dc_up_block.3} parent=27 // pred_check
        %p153 = pneg %p30
      $region30: #{dc_up_block.3} parent=27 // pred_check_branch
        %155 = sbr.rel (%p153) target = $region32
      $region31: #{dc_up_block.3} parent=27 // pred_region
        %s156 = smul.u32 32, %s10
        %p157 = scmp.lt.s32.totalorder %s156, 63
        %s158 = scalar_select %p157, %s156, 63
        %s159 = smul.addr %s158, 4
        %s160 = scalar_lea.vmem %s0, %s159
        %s161 = smul.u32 32, %s10
      $region32: #{dc_up_block.3} parent=27 // pred_fallthru
        _
    $region28: #{dc_up_block.3} parent=5 // pred_fallthru
      _
    %p162 = scmp.le.s32.totalorder 1, %s10
    %p163 = scmp.lt.s32.totalorder %s10, 3
    %p164 = pnand %p162, %p163
    %p165 = pneg %p164
    // Predicated region
    $region33: #{dc_up_block.3} parent=5 // pred_check
      _
    $region34: #{dc_up_block.3} parent=5 // pred_check_branch
      %167 = sbr.rel (%p164) target = $region36
    $region35: #{dc_up_block.3} parent=5 // pred_region
      %s168 = ssub.s32 %s10, 1
      %s169 = smul.u32 32, %s15
      %p170 = scmp.lt.s32.totalorder %s169, 63
      %s171 = scalar_select %p170, %s169, 63
      %s172 = smul.addr %s171, 4
      %s173 = scalar_lea.vmem %s0, %s172
      %p174 = pneg %p36
      %p175 = pneg %p33
      %p176 = pneg %p57
      %p177 = pneg %p54
      %p178 = pneg %p78
      %p179 = pneg %p75
      %p180 = pneg %p99
      %p181 = pneg %p96
      %p182 = pneg %p125
      %p183 = pneg %p122
      %s184 = smul.u32 16, %s15
      %p185 = scmp.lt.s32.totalorder %s184, 31
      %s186 = scalar_select %p185, %s184, 31
      %s187 = smul.addr %s186, 4
      %s188 = smul.addr %s187, 8
      %s189 = scalar_lea.vmem %s4, %s188
      %s190 = smul.u32 32, %s15
      %p191 = scmp.lt.s32.totalorder %s190, 63
      %s192 = scalar_select %p191, %s190, 63
      %s193 = smul.addr %s192, 4
      %s194 = scalar_lea.vmem %s0, %s193
      %s195 = smul.u32 32, %s15
      %s196 = smul.u32 16, %s15
      %p197 = scmp.lt.s32.totalorder %s196, 31
      %s198 = scalar_select %p197, %s196, 31
      %s199 = smul.addr %s198, 4
      %s200 = smul.addr %s199, 8
      %s201 = scalar_lea.vmem %s4, %s200
      %s202 = smul.u32 16, %s15
      %v204 = vld [vmem:[%s194] sm:$0xf]
      %v205 = vld [vmem:[%s194 + $0x4] sm:$0xf]
      %v206 = vld [vmem:[%s194 + $0x8] sm:$0xf]
      %v207 = vld [vmem:[%s194 + $0xc] sm:$0xf]
      %v208 = vld [vmem:[%s194 + $0x10] sm:$0xf]
      %v209 = vld [vmem:[%s194 + $0x14] sm:$0xf]
      %v210 = vld [vmem:[%s194 + $0x18] sm:$0xf]
      %v211 = vld [vmem:[%s194 + $0x1c] sm:$0xf]
      %v212 = vld [vmem:[%s194 + $0x20] sm:$0xf]
      %v213 = vld [vmem:[%s194 + $0x24] sm:$0xf]
      %v214 = vld [vmem:[%s194 + $0x28] sm:$0xf]
      %v215 = vld [vmem:[%s194 + $0x2c] sm:$0xf]
      %v216 = vld [vmem:[%s194 + $0x30] sm:$0xf]
      %v217 = vld [vmem:[%s194 + $0x34] sm:$0xf]
      %v218 = vld [vmem:[%s194 + $0x38] sm:$0xf]
      %v219 = vld [vmem:[%s194 + $0x3c] sm:$0xf]
      %v220 = vld [vmem:[%s194 + $0x40] sm:$0xf]
      %v221 = vld [vmem:[%s194 + $0x44] sm:$0xf]
      %v222 = vld [vmem:[%s194 + $0x48] sm:$0xf]
      %v223 = vld [vmem:[%s194 + $0x4c] sm:$0xf]
      %v224 = vld [vmem:[%s194 + $0x50] sm:$0xf]
      %v225 = vld [vmem:[%s194 + $0x54] sm:$0xf]
      %v226 = vld [vmem:[%s194 + $0x58] sm:$0xf]
      %v227 = vld [vmem:[%s194 + $0x5c] sm:$0xf]
      %v228 = vld [vmem:[%s194 + $0x60] sm:$0xf]
      %v229 = vld [vmem:[%s194 + $0x64] sm:$0xf]
      %v230 = vld [vmem:[%s194 + $0x68] sm:$0xf]
      %v231 = vld [vmem:[%s194 + $0x6c] sm:$0xf]
      %v232 = vld [vmem:[%s194 + $0x70] sm:$0xf]
      %v233 = vld [vmem:[%s194 + $0x74] sm:$0xf]
      %v234 = vld [vmem:[%s194 + $0x78] sm:$0xf]
      %v235 = vld [vmem:[%s194 + $0x7c] sm:$0xf]
      %v236 = vld [vmem:[%s2] sm:$0x1]
      %v237 = vld [vmem:[%s3] sm:$0x1]
      %v238 = vld [vmem:[%s1] sm:$0xf]
      %v239 = vld [vmem:[%s1 + $0x4] sm:$0xf]
      %v240 = vld [vmem:[%s1 + $0x8] sm:$0xf]
      %v241 = vld [vmem:[%s1 + $0xc] sm:$0xf]
      %v242 = vld [vmem:[%s1 + $0x10] sm:$0x3]
      %v275 = vunpack.c.l.b16 %v204
      %v276 = vunpack.c.l.b16 %v205
      %v277 = vunpack.c.l.b16 %v206
      %v278 = vunpack.c.l.b16 %v207
      %v279 = vunpack.c.l.b16 %v208
      %v280 = vunpack.c.l.b16 %v209
      %v281 = vunpack.c.l.b16 %v210
      %v282 = vunpack.c.l.b16 %v211
      %v283 = vunpack.c.l.b16 %v212
      %v284 = vunpack.c.l.b16 %v213
      %v285 = vunpack.c.l.b16 %v214
      %v286 = vunpack.c.l.b16 %v215
      %v287 = vunpack.c.l.b16 %v216
      %v288 = vunpack.c.l.b16 %v217
      %v289 = vunpack.c.l.b16 %v218
      %v290 = vunpack.c.l.b16 %v219
      %v291 = vunpack.c.l.b16 %v220
      %v292 = vunpack.c.l.b16 %v221
      %v293 = vunpack.c.l.b16 %v222
      %v294 = vunpack.c.l.b16 %v223
      %v295 = vunpack.c.l.b16 %v224
      %v296 = vunpack.c.l.b16 %v225
      %v297 = vunpack.c.l.b16 %v226
      %v298 = vunpack.c.l.b16 %v227
      %v299 = vunpack.c.l.b16 %v228
      %v300 = vunpack.c.l.b16 %v229
      %v301 = vunpack.c.l.b16 %v230
      %v302 = vunpack.c.l.b16 %v231
      %v303 = vunpack.c.l.b16 %v232
      %v304 = vunpack.c.l.b16 %v233
      %v305 = vunpack.c.l.b16 %v234
      %v306 = vunpack.c.l.b16 %v235
      %v307 = vpack.c.b16 %v276, %v275
      %v308 = vpack.c.b16 %v278, %v277
      %v309 = vpack.c.b16 %v280, %v279
      %v310 = vpack.c.b16 %v282, %v281
      %v311 = vpack.c.b16 %v284, %v283
      %v312 = vpack.c.b16 %v286, %v285
      %v313 = vpack.c.b16 %v288, %v287
      %v314 = vpack.c.b16 %v290, %v289
      %v315 = vpack.c.b16 %v292, %v291
      %v316 = vpack.c.b16 %v294, %v293
      %v317 = vpack.c.b16 %v296, %v295
      %v318 = vpack.c.b16 %v298, %v297
      %v319 = vpack.c.b16 %v300, %v299
      %v320 = vpack.c.b16 %v302, %v301
      %v321 = vpack.c.b16 %v304, %v303
      %v322 = vpack.c.b16 %v306, %v305
      %v328 = vunpack.c.l.b16 %v238
      %v329 = vunpack.c.l.b16 %v239
      %v330 = vunpack.c.l.b16 %v240
      %v331 = vunpack.c.l.b16 %v241
      %v332 = vunpack.c.l.b16 %v242
      %v333 = vpack.c.b16 %v329, %v328
      %v334 = vpack.c.b16 %v331, %v330
      %v335 = vpack.c.b16 %v332, %v332
      %vm338 = vcmask 293888
      %v340 = vsel %vm338, %v307, 0
      %v343 = vsel %vm338, %v308, 0
      %v346 = vsel %vm338, %v309, 0
      %v349 = vsel %vm338, %v310, 0
      %v352 = vsel %vm338, %v311, 0
      %v355 = vsel %vm338, %v312, 0
      %v358 = vsel %vm338, %v313, 0
      %v361 = vsel %vm338, %v314, 0
      %v364 = vsel %vm338, %v315, 0
      %v367 = vsel %vm338, %v316, 0
      %v370 = vsel %vm338, %v317, 0
      %v373 = vsel %vm338, %v318, 0
      %v376 = vsel %vm338, %v319, 0
      %v379 = vsel %vm338, %v320, 0
      %v382 = vsel %vm338, %v321, 0
      %v385 = vsel %vm338, %v322, 0
      %vm387 = vcmask 1041408
      %v389 = vsel %vm387, %v335, 0
      %391 = vmatprep.subr.bf16.mxu0 0
      %392 = vmatpush1.bf16.msra.mxu0 %v333
      %393 = vmatprep.subr.bf16.mxu0 0
      %394 = vmatpush1.bf16.msra.mxu0 %v334
      %395 = vmatprep.subr.bf16.mxu0 0
      %396 = vmatpush1.bf16.msra.mxu0 %v389
      %397 = vmatprep.subr.bf16.mxu0 0
      %398 = vmatpush1.bf16.msra.mxu0 0
      %399 = vmatprep.subr.bf16.mxu0 0
      %400 = vmatpush1.bf16.msra.mxu0 0
      %401 = vmatprep.subr.bf16.mxu0 0
      %402 = vmatpush1.bf16.msra.mxu0 0
      %403 = vmatprep.subr.bf16.mxu0 0
      %404 = vmatpush1.bf16.msra.mxu0 0
      %405 = vmatprep.subr.bf16.mxu0 0
      %406 = vmatpush1.bf16.msra.mxu0 0
      %407 = vmatprep.subr.bf16.mxu0 0
      %408 = vmatpush1.bf16.msra.mxu0 0
      %409 = vmatprep.subr.bf16.mxu0 0
      %410 = vmatpush1.bf16.msra.mxu0 0
      %411 = vmatprep.subr.bf16.mxu0 0
      %412 = vmatpush1.bf16.msra.mxu0 0
      %413 = vmatprep.subr.bf16.mxu0 0
      %414 = vmatpush1.bf16.msra.mxu0 0
      %415 = vmatprep.subr.bf16.mxu0 0
      %416 = vmatpush1.bf16.msra.mxu0 0
      %417 = vmatprep.subr.bf16.mxu0 0
      %418 = vmatpush1.bf16.msra.mxu0 0
      %419 = vmatprep.subr.bf16.mxu0 0
      %420 = vmatpush1.bf16.msra.mxu0 0
      %421 = vmatprep.subr.bf16.mxu0 0
      %422 = vmatpush1.bf16.msra.mxu0 0
      %423 = vmatprep.mubr.bf16.mxu0 0
      %424 = vmatmul.mubr.bf16.gmra.mrb[0].mxu0 %v340
      %v425 = vpop.f32.mrb[0].mxu0
      %v426 = vadd.f32 0.0, %v425
      %v427 = vpop.f32.mrb[0].mxu0
      %v428 = vpop.f32.mrb[0].mxu0
      %v429 = vadd.f32 0.0, %v428
      %v430 = vpop.f32.mrb[0].mxu0
      %431 = vmatprep.mubr.bf16.mxu0 0
      %432 = vmatmul.mubr.bf16.gmra.mrb[0].mxu0 %v343
      %v433 = vpop.f32.mrb[0].mxu0
      %v434 = vadd.f32 0.0, %v433
      %v435 = vpop.f32.mrb[0].mxu0
      %v436 = vpop.f32.mrb[0].mxu0
      %v437 = vadd.f32 0.0, %v436
      %v438 = vpop.f32.mrb[0].mxu0
      %439 = vmatprep.mubr.bf16.mxu0 0
      %440 = vmatmul.mubr.bf16.gmra.mrb[0].mxu0 %v346
      %v441 = vpop.f32.mrb[0].mxu0
      %v442 = vadd.f32 0.0, %v441
      %v443 = vpop.f32.mrb[0].mxu0
      %v444 = vpop.f32.mrb[0].mxu0
      %v445 = vadd.f32 0.0, %v444
      %v446 = vpop.f32.mrb[0].mxu0
      %447 = vmatprep.mubr.bf16.mxu0 0
      %448 = vmatmul.mubr.bf16.gmra.mrb[0].mxu0 %v349
      %v449 = vpop.f32.mrb[0].mxu0
      %v450 = vadd.f32 0.0, %v449
      %v451 = vpop.f32.mrb[0].mxu0
      %v452 = vpop.f32.mrb[0].mxu0
      %v453 = vadd.f32 0.0, %v452
      %v454 = vpop.f32.mrb[0].mxu0
      %455 = vmatprep.mubr.bf16.mxu0 0
      %456 = vmatmul.mubr.bf16.gmra.mrb[0].mxu0 %v352
      %v457 = vpop.f32.mrb[0].mxu0
      %v458 = vadd.f32 0.0, %v457
      %v459 = vpop.f32.mrb[0].mxu0
      %v460 = vpop.f32.mrb[0].mxu0
      %v461 = vadd.f32 0.0, %v460
      %v462 = vpop.f32.mrb[0].mxu0
      %463 = vmatprep.mubr.bf16.mxu0 0
      %464 = vmatmul.mubr.bf16.gmra.mrb[0].mxu0 %v355
      %v465 = vpop.f32.mrb[0].mxu0
      %v466 = vadd.f32 0.0, %v465
      %v467 = vpop.f32.mrb[0].mxu0
      %v468 = vpop.f32.mrb[0].mxu0
      %v469 = vadd.f32 0.0, %v468
      %v470 = vpop.f32.mrb[0].mxu0
      %471 = vmatprep.mubr.bf16.mxu0 0
      %472 = vmatmul.mubr.bf16.gmra.mrb[0].mxu0 %v358
      %v473 = vpop.f32.mrb[0].mxu0
      %v474 = vadd.f32 0.0, %v473
      %v475 = vpop.f32.mrb[0].mxu0
      %v476 = vpop.f32.mrb[0].mxu0
      %v477 = vadd.f32 0.0, %v476
      %v478 = vpop.f32.mrb[0].mxu0
      %479 = vmatprep.mubr.bf16.mxu0 0
      %480 = vmatmul.mubr.bf16.gmra.mrb[0].mxu0 %v361
      %v481 = vpop.f32.mrb[0].mxu0
      %v482 = vadd.f32 0.0, %v481
      %v483 = vpop.f32.mrb[0].mxu0
      %v484 = vpop.f32.mrb[0].mxu0
      %v485 = vadd.f32 0.0, %v484
      %v486 = vpop.f32.mrb[0].mxu0
      %487 = vmatprep.mubr.bf16.mxu0 0
      %488 = vmatmul.mubr.bf16.gmra.mrb[0].mxu0 %v364
      %v489 = vpop.f32.mrb[0].mxu0
      %v490 = vadd.f32 0.0, %v489
      %v491 = vpop.f32.mrb[0].mxu0
      %v492 = vpop.f32.mrb[0].mxu0
      %v493 = vadd.f32 0.0, %v492
      %v494 = vpop.f32.mrb[0].mxu0
      %495 = vmatprep.mubr.bf16.mxu0 0
      %496 = vmatmul.mubr.bf16.gmra.mrb[0].mxu0 %v367
      %v497 = vpop.f32.mrb[0].mxu0
      %v498 = vadd.f32 0.0, %v497
      %v499 = vpop.f32.mrb[0].mxu0
      %v500 = vpop.f32.mrb[0].mxu0
      %v501 = vadd.f32 0.0, %v500
      %v502 = vpop.f32.mrb[0].mxu0
      %503 = vmatprep.mubr.bf16.mxu0 0
      %504 = vmatmul.mubr.bf16.gmra.mrb[0].mxu0 %v370
      %v505 = vpop.f32.mrb[0].mxu0
      %v506 = vadd.f32 0.0, %v505
      %v507 = vpop.f32.mrb[0].mxu0
      %v508 = vpop.f32.mrb[0].mxu0
      %v509 = vadd.f32 0.0, %v508
      %v510 = vpop.f32.mrb[0].mxu0
      %511 = vmatprep.mubr.bf16.mxu0 0
      %512 = vmatmul.mubr.bf16.gmra.mrb[0].mxu0 %v373
      %v513 = vpop.f32.mrb[0].mxu0
      %v514 = vadd.f32 0.0, %v513
      %v515 = vpop.f32.mrb[0].mxu0
      %v516 = vpop.f32.mrb[0].mxu0
      %v517 = vadd.f32 0.0, %v516
      %v518 = vpop.f32.mrb[0].mxu0
      %519 = vmatprep.mubr.bf16.mxu0 0
      %520 = vmatmul.mubr.bf16.gmra.mrb[0].mxu0 %v376
      %v521 = vpop.f32.mrb[0].mxu0
      %v522 = vadd.f32 0.0, %v521
      %v523 = vpop.f32.mrb[0].mxu0
      %v524 = vpop.f32.mrb[0].mxu0
      %v525 = vadd.f32 0.0, %v524
      %v526 = vpop.f32.mrb[0].mxu0
      %527 = vmatprep.mubr.bf16.mxu0 0
      %528 = vmatmul.mubr.bf16.gmra.mrb[0].mxu0 %v379
      %v529 = vpop.f32.mrb[0].mxu0
      %v530 = vadd.f32 0.0, %v529
      %v531 = vpop.f32.mrb[0].mxu0
      %v532 = vpop.f32.mrb[0].mxu0
      %v533 = vadd.f32 0.0, %v532
      %v534 = vpop.f32.mrb[0].mxu0
      %535 = vmatprep.mubr.bf16.mxu0 0
      %536 = vmatmul.mubr.bf16.gmra.mrb[0].mxu0 %v382
      %v537 = vpop.f32.mrb[0].mxu0
      %v538 = vadd.f32 0.0, %v537
      %v539 = vpop.f32.mrb[0].mxu0
      %v540 = vpop.f32.mrb[0].mxu0
      %v541 = vadd.f32 0.0, %v540
      %v542 = vpop.f32.mrb[0].mxu0
      %543 = vmatprep.mubr.bf16.mxu0 0
      %544 = vmatmul.mubr.bf16.gmra.mrb[0].mxu0 %v385
      %v545 = vpop.f32.mrb[0].mxu0
      %v546 = vadd.f32 0.0, %v545
      %v547 = vpop.f32.mrb[0].mxu0
      %v548 = vpop.f32.mrb[0].mxu0
      %v549 = vadd.f32 0.0, %v548
      %v550 = vpop.f32.mrb[0].mxu0
      %551 = vdwg.mxu0
      %v553 = vlaneseq
      %v554 = vshrl.u32 %v553, 7
      %v555 = vsub.s32 0, %v554
      %v556 = vrot.slane %v236, %v555
      %v558 = vmul.f32 %v426, %v556
      %v559 = vmul.f32 %v429, %v556
      %v560 = vmul.f32 %v434, %v556
      %v561 = vmul.f32 %v437, %v556
      %v562 = vmul.f32 %v442, %v556
      %v563 = vmul.f32 %v445, %v556
      %v564 = vmul.f32 %v450, %v556
      %v565 = vmul.f32 %v453, %v556
      %v566 = vmul.f32 %v458, %v556
      %v567 = vmul.f32 %v461, %v556
      %v568 = vmul.f32 %v466, %v556
      %v569 = vmul.f32 %v469, %v556
      %v570 = vmul.f32 %v474, %v556
      %v571 = vmul.f32 %v477, %v556
      %v572 = vmul.f32 %v482, %v556
      %v573 = vmul.f32 %v485, %v556
      %v574 = vmul.f32 %v490, %v556
      %v575 = vmul.f32 %v493, %v556
      %v576 = vmul.f32 %v498, %v556
      %v577 = vmul.f32 %v501, %v556
      %v578 = vmul.f32 %v506, %v556
      %v579 = vmul.f32 %v509, %v556
      %v580 = vmul.f32 %v514, %v556
      %v581 = vmul.f32 %v517, %v556
      %v582 = vmul.f32 %v522, %v556
      %v583 = vmul.f32 %v525, %v556
      %v584 = vmul.f32 %v530, %v556
      %v585 = vmul.f32 %v533, %v556
      %v586 = vmul.f32 %v538, %v556
      %v587 = vmul.f32 %v541, %v556
      %v588 = vmul.f32 %v546, %v556
      %v589 = vmul.f32 %v549, %v556
      %v591 = vlaneseq
      %v592 = vshrl.u32 %v591, 7
      %v593 = vsub.s32 0, %v592
      %v594 = vrot.slane %v237, %v593
      %v596 = vadd.f32 %v558, %v594
      %v597 = vadd.f32 %v559, %v594
      %v598 = vadd.f32 %v560, %v594
      %v599 = vadd.f32 %v561, %v594
      %v600 = vadd.f32 %v562, %v594
      %v601 = vadd.f32 %v563, %v594
      %v602 = vadd.f32 %v564, %v594
      %v603 = vadd.f32 %v565, %v594
      %v604 = vadd.f32 %v566, %v594
      %v605 = vadd.f32 %v567, %v594
      %v606 = vadd.f32 %v568, %v594
      %v607 = vadd.f32 %v569, %v594
      %v608 = vadd.f32 %v570, %v594
      %v609 = vadd.f32 %v571, %v594
      %v610 = vadd.f32 %v572, %v594
      %v611 = vadd.f32 %v573, %v594
      %v612 = vadd.f32 %v574, %v594
      %v613 = vadd.f32 %v575, %v594
      %v614 = vadd.f32 %v576, %v594
      %v615 = vadd.f32 %v577, %v594
      %v616 = vadd.f32 %v578, %v594
      %v617 = vadd.f32 %v579, %v594
      %v618 = vadd.f32 %v580, %v594
      %v619 = vadd.f32 %v581, %v594
      %v620 = vadd.f32 %v582, %v594
      %v621 = vadd.f32 %v583, %v594
      %v622 = vadd.f32 %v584, %v594
      %v623 = vadd.f32 %v585, %v594
      %v624 = vadd.f32 %v586, %v594
      %v625 = vadd.f32 %v587, %v594
      %v626 = vadd.f32 %v588, %v594
      %v627 = vadd.f32 %v589, %v594
      %vm628 = vcmp.ge.f32.partialorder %v596, 0.0
      %vm629 = vcmp.ge.f32.partialorder %v597, 0.0
      %vm630 = vcmp.ge.f32.partialorder %v598, 0.0
      %vm631 = vcmp.ge.f32.partialorder %v599, 0.0
      %vm632 = vcmp.ge.f32.partialorder %v600, 0.0
      %vm633 = vcmp.ge.f32.partialorder %v601, 0.0
      %vm634 = vcmp.ge.f32.partialorder %v602, 0.0
      %vm635 = vcmp.ge.f32.partialorder %v603, 0.0
      %vm636 = vcmp.ge.f32.partialorder %v604, 0.0
      %vm637 = vcmp.ge.f32.partialorder %v605, 0.0
      %vm638 = vcmp.ge.f32.partialorder %v606, 0.0
      %vm639 = vcmp.ge.f32.partialorder %v607, 0.0
      %vm640 = vcmp.ge.f32.partialorder %v608, 0.0
      %vm641 = vcmp.ge.f32.partialorder %v609, 0.0
      %vm642 = vcmp.ge.f32.partialorder %v610, 0.0
      %vm643 = vcmp.ge.f32.partialorder %v611, 0.0
      %vm644 = vcmp.ge.f32.partialorder %v612, 0.0
      %vm645 = vcmp.ge.f32.partialorder %v613, 0.0
      %vm646 = vcmp.ge.f32.partialorder %v614, 0.0
      %vm647 = vcmp.ge.f32.partialorder %v615, 0.0
      %vm648 = vcmp.ge.f32.partialorder %v616, 0.0
      %vm649 = vcmp.ge.f32.partialorder %v617, 0.0
      %vm650 = vcmp.ge.f32.partialorder %v618, 0.0
      %vm651 = vcmp.ge.f32.partialorder %v619, 0.0
      %vm652 = vcmp.ge.f32.partialorder %v620, 0.0
      %vm653 = vcmp.ge.f32.partialorder %v621, 0.0
      %vm654 = vcmp.ge.f32.partialorder %v622, 0.0
      %vm655 = vcmp.ge.f32.partialorder %v623, 0.0
      %vm656 = vcmp.ge.f32.partialorder %v624, 0.0
      %vm657 = vcmp.ge.f32.partialorder %v625, 0.0
      %vm658 = vcmp.ge.f32.partialorder %v626, 0.0
      %vm659 = vcmp.ge.f32.partialorder %v627, 0.0
      %v660 = vmul.f32 %v596, 0.2
      %v661 = vmul.f32 %v597, 0.2
      %v662 = vmul.f32 %v598, 0.2
      %v663 = vmul.f32 %v599, 0.2
      %v664 = vmul.f32 %v600, 0.2
      %v665 = vmul.f32 %v601, 0.2
      %v666 = vmul.f32 %v602, 0.2
      %v667 = vmul.f32 %v603, 0.2
      %v668 = vmul.f32 %v604, 0.2
      %v669 = vmul.f32 %v605, 0.2
      %v670 = vmul.f32 %v606, 0.2
      %v671 = vmul.f32 %v607, 0.2
      %v672 = vmul.f32 %v608, 0.2
      %v673 = vmul.f32 %v609, 0.2
      %v674 = vmul.f32 %v610, 0.2
      %v675 = vmul.f32 %v611, 0.2
      %v676 = vmul.f32 %v612, 0.2
      %v677 = vmul.f32 %v613, 0.2
      %v678 = vmul.f32 %v614, 0.2
      %v679 = vmul.f32 %v615, 0.2
      %v680 = vmul.f32 %v616, 0.2
      %v681 = vmul.f32 %v617, 0.2
      %v682 = vmul.f32 %v618, 0.2
      %v683 = vmul.f32 %v619, 0.2
      %v684 = vmul.f32 %v620, 0.2
      %v685 = vmul.f32 %v621, 0.2
      %v686 = vmul.f32 %v622, 0.2
      %v687 = vmul.f32 %v623, 0.2
      %v688 = vmul.f32 %v624, 0.2
      %v689 = vmul.f32 %v625, 0.2
      %v690 = vmul.f32 %v626, 0.2
      %v691 = vmul.f32 %v627, 0.2
      %v692 = vsel %vm628, %v596, %v660
      %v693 = vsel %vm629, %v597, %v661
      %v694 = vsel %vm630, %v598, %v662
      %v695 = vsel %vm631, %v599, %v663
      %v696 = vsel %vm632, %v600, %v664
      %v697 = vsel %vm633, %v601, %v665
      %v698 = vsel %vm634, %v602, %v666
      %v699 = vsel %vm635, %v603, %v667
      %v700 = vsel %vm636, %v604, %v668
      %v701 = vsel %vm637, %v605, %v669
      %v702 = vsel %vm638, %v606, %v670
      %v703 = vsel %vm639, %v607, %v671
      %v704 = vsel %vm640, %v608, %v672
      %v705 = vsel %vm641, %v609, %v673
      %v706 = vsel %vm642, %v610, %v674
      %v707 = vsel %vm643, %v611, %v675
      %v708 = vsel %vm644, %v612, %v676
      %v709 = vsel %vm645, %v613, %v677
      %v710 = vsel %vm646, %v614, %v678
      %v711 = vsel %vm647, %v615, %v679
      %v712 = vsel %vm648, %v616, %v680
      %v713 = vsel %vm649, %v617, %v681
      %v714 = vsel %vm650, %v618, %v682
      %v715 = vsel %vm651, %v619, %v683
      %v716 = vsel %vm652, %v620, %v684
      %v717 = vsel %vm653, %v621, %v685
      %v718 = vsel %vm654, %v622, %v686
      %v719 = vsel %vm655, %v623, %v687
      %v720 = vsel %vm656, %v624, %v688
      %v721 = vsel %vm657, %v625, %v689
      %v722 = vsel %vm658, %v626, %v690
      %v723 = vsel %vm659, %v627, %v691
      %vm724 = vcmask 130048
      %725 = vst.msk [vmem:[%s201] sm:$0xff] %vm724, %v692
      %726 = vst.msk [vmem:[%s201 + $0x8] sm:$0xff] %vm724, %v693
      %727 = vst.msk [vmem:[%s201 + $0x20] sm:$0xff] %vm724, %v694
      %728 = vst.msk [vmem:[%s201 + $0x28] sm:$0xff] %vm724, %v695
      %729 = vst.msk [vmem:[%s201 + $0x40] sm:$0xff] %vm724, %v696
      %730 = vst.msk [vmem:[%s201 + $0x48] sm:$0xff] %vm724, %v697
      %731 = vst.msk [vmem:[%s201 + $0x60] sm:$0xff] %vm724, %v698
      %732 = vst.msk [vmem:[%s201 + $0x68] sm:$0xff] %vm724, %v699
      %733 = vst.msk [vmem:[%s201 + $0x80] sm:$0xff] %vm724, %v700
      %734 = vst.msk [vmem:[%s201 + $0x88] sm:$0xff] %vm724, %v701
      %735 = vst.msk [vmem:[%s201 + $0xa0] sm:$0xff] %vm724, %v702
      %736 = vst.msk [vmem:[%s201 + $0xa8] sm:$0xff] %vm724, %v703
      %737 = vst.msk [vmem:[%s201 + $0xc0] sm:$0xff] %vm724, %v704
      %738 = vst.msk [vmem:[%s201 + $0xc8] sm:$0xff] %vm724, %v705
      %739 = vst.msk [vmem:[%s201 + $0xe0] sm:$0xff] %vm724, %v706
      %740 = vst.msk [vmem:[%s201 + $0xe8] sm:$0xff] %vm724, %v707
      %741 = vst.msk [vmem:[%s201 + $0x100] sm:$0xff] %vm724, %v708
      %742 = vst.msk [vmem:[%s201 + $0x108] sm:$0xff] %vm724, %v709
      %743 = vst.msk [vmem:[%s201 + $0x120] sm:$0xff] %vm724, %v710
      %744 = vst.msk [vmem:[%s201 + $0x128] sm:$0xff] %vm724, %v711
      %745 = vst.msk [vmem:[%s201 + $0x140] sm:$0xff] %vm724, %v712
      %746 = vst.msk [vmem:[%s201 + $0x148] sm:$0xff] %vm724, %v713
      %747 = vst.msk [vmem:[%s201 + $0x160] sm:$0xff] %vm724, %v714
      %748 = vst.msk [vmem:[%s201 + $0x168] sm:$0xff] %vm724, %v715
      %749 = vst.msk [vmem:[%s201 + $0x180] sm:$0xff] %vm724, %v716
      %750 = vst.msk [vmem:[%s201 + $0x188] sm:$0xff] %vm724, %v717
      %751 = vst.msk [vmem:[%s201 + $0x1a0] sm:$0xff] %vm724, %v718
      %752 = vst.msk [vmem:[%s201 + $0x1a8] sm:$0xff] %vm724, %v719
      %753 = vst.msk [vmem:[%s201 + $0x1c0] sm:$0xff] %vm724, %v720
      %754 = vst.msk [vmem:[%s201 + $0x1c8] sm:$0xff] %vm724, %v721
      %755 = vst.msk [vmem:[%s201 + $0x1e0] sm:$0xff] %vm724, %v722
      %756 = vst.msk [vmem:[%s201 + $0x1e8] sm:$0xff] %vm724, %v723
      %s757 = scalar_lea.vmem %s1, 20
      %v758 = vld [vmem:[%s757] sm:$0xf]
      %v759 = vld [vmem:[%s757 + $0x4] sm:$0xf]
      %v760 = vld [vmem:[%s757 + $0x8] sm:$0xf]
      %v761 = vld [vmem:[%s757 + $0xc] sm:$0xf]
      %v762 = vld [vmem:[%s757 + $0x10] sm:$0x3]
      %v768 = vunpack.c.l.b16 %v758
      %v769 = vunpack.c.l.b16 %v759
      %v770 = vunpack.c.l.b16 %v760
      %v771 = vunpack.c.l.b16 %v761
      %v772 = vunpack.c.l.b16 %v762
      %v773 = vpack.c.b16 %v769, %v768
      %v774 = vpack.c.b16 %v771, %v770
      %v775 = vpack.c.b16 %v772, %v772
      %v779 = vsel %vm387, %v775, 0
      %781 = vmatprep.subr.bf16.mxu0 0
      %782 = vmatpush1.bf16.msra.mxu0 %v773
      %783 = vmatprep.subr.bf16.mxu0 0
      %784 = vmatpush1.bf16.msra.mxu0 %v774
      %785 = vmatprep.subr.bf16.mxu0 0
      %786 = vmatpush1.bf16.msra.mxu0 %v779
      %787 = vmatprep.subr.bf16.mxu0 0
      %788 = vmatpush1.bf16.msra.mxu0 0
      %789 = vmatprep.subr.bf16.mxu0 0
      %790 = vmatpush1.bf16.msra.mxu0 0
      %791 = vmatprep.subr.bf16.mxu0 0
      %792 = vmatpush1.bf16.msra.mxu0 0
      %793 = vmatprep.subr.bf16.mxu0 0
      %794 = vmatpush1.bf16.msra.mxu0 0
      %795 = vmatprep.subr.bf16.mxu0 0
      %796 = vmatpush1.bf16.msra.mxu0 0
      %797 = vmatprep.subr.bf16.mxu0 0
      %798 = vmatpush1.bf16.msra.mxu0 0
      %799 = vmatprep.subr.bf16.mxu0 0
      %800 = vmatpush1.bf16.msra.mxu0 0
      %801 = vmatprep.subr.bf16.mxu0 0
      %802 = vmatpush1.bf16.msra.mxu0 0
      %803 = vmatprep.subr.bf16.mxu0 0
      %804 = vmatpush1.bf16.msra.mxu0 0
      %805 = vmatprep.subr.bf16.mxu0 0
      %806 = vmatpush1.bf16.msra.mxu0 0
      %807 = vmatprep.subr.bf16.mxu0 0
      %808 = vmatpush1.bf16.msra.mxu0 0
      %809 = vmatprep.subr.bf16.mxu0 0
      %810 = vmatpush1.bf16.msra.mxu0 0
      %811 = vmatprep.subr.bf16.mxu0 0
      %812 = vmatpush1.bf16.msra.mxu0 0
      %813 = vmatprep.mubr.bf16.mxu0 0
      %814 = vmatmul.mubr.bf16.gmra.mrb[0].mxu0 %v340
      %v815 = vpop.f32.mrb[0].mxu0
      %v816 = vadd.f32 0.0, %v815
      %v817 = vpop.f32.mrb[0].mxu0
      %v818 = vpop.f32.mrb[0].mxu0
      %v819 = vadd.f32 0.0, %v818
      %v820 = vpop.f32.mrb[0].mxu0
      %821 = vmatprep.mubr.bf16.mxu0 0
      %822 = vmatmul.mubr.bf16.gmra.mrb[0].mxu0 %v343
      %v823 = vpop.f32.mrb[0].mxu0
      %v824 = vadd.f32 0.0, %v823
      %v825 = vpop.f32.mrb[0].mxu0
      %v826 = vpop.f32.mrb[0].mxu0
      %v827 = vadd.f32 0.0, %v826
      %v828 = vpop.f32.mrb[0].mxu0
      %829 = vmatprep.mubr.bf16.mxu0 0
      %830 = vmatmul.mubr.bf16.gmra.mrb[0].mxu0 %v346
      %v831 = vpop.f32.mrb[0].mxu0
      %v832 = vadd.f32 0.0, %v831
      %v833 = vpop.f32.mrb[0].mxu0
      %v834 = vpop.f32.mrb[0].mxu0
      %v835 = vadd.f32 0.0, %v834
      %v836 = vpop.f32.mrb[0].mxu0
      %837 = vmatprep.mubr.bf16.mxu0 0
      %838 = vmatmul.mubr.bf16.gmra.mrb[0].mxu0 %v349
      %v839 = vpop.f32.mrb[0].mxu0
      %v840 = vadd.f32 0.0, %v839
      %v841 = vpop.f32.mrb[0].mxu0
      %v842 = vpop.f32.mrb[0].mxu0
      %v843 = vadd.f32 0.0, %v842
      %v844 = vpop.f32.mrb[0].mxu0
      %845 = vmatprep.mubr.bf16.mxu0 0
      %846 = vmatmul.mubr.bf16.gmra.mrb[0].mxu0 %v352
      %v847 = vpop.f32.mrb[0].mxu0
      %v848 = vadd.f32 0.0, %v847
      %v849 = vpop.f32.mrb[0].mxu0
      %v850 = vpop.f32.mrb[0].mxu0
      %v851 = vadd.f32 0.0, %v850
      %v852 = vpop.f32.mrb[0].mxu0
      %853 = vmatprep.mubr.bf16.mxu0 0
      %854 = vmatmul.mubr.bf16.gmra.mrb[0].mxu0 %v355
      %v855 = vpop.f32.mrb[0].mxu0
      %v856 = vadd.f32 0.0, %v855
      %v857 = vpop.f32.mrb[0].mxu0
      %v858 = vpop.f32.mrb[0].mxu0
      %v859 = vadd.f32 0.0, %v858
      %v860 = vpop.f32.mrb[0].mxu0
      %861 = vmatprep.mubr.bf16.mxu0 0
      %862 = vmatmul.mubr.bf16.gmra.mrb[0].mxu0 %v358
      %v863 = vpop.f32.mrb[0].mxu0
      %v864 = vadd.f32 0.0, %v863
      %v865 = vpop.f32.mrb[0].mxu0
      %v866 = vpop.f32.mrb[0].mxu0
      %v867 = vadd.f32 0.0, %v866
      %v868 = vpop.f32.mrb[0].mxu0
      %869 = vmatprep.mubr.bf16.mxu0 0
      %870 = vmatmul.mubr.bf16.gmra.mrb[0].mxu0 %v361
      %v871 = vpop.f32.mrb[0].mxu0
      %v872 = vadd.f32 0.0, %v871
      %v873 = vpop.f32.mrb[0].mxu0
      %v874 = vpop.f32.mrb[0].mxu0
      %v875 = vadd.f32 0.0, %v874
      %v876 = vpop.f32.mrb[0].mxu0
      %877 = vmatprep.mubr.bf16.mxu0 0
      %878 = vmatmul.mubr.bf16.gmra.mrb[0].mxu0 %v364
      %v879 = vpop.f32.mrb[0].mxu0
      %v880 = vadd.f32 0.0, %v879
      %v881 = vpop.f32.mrb[0].mxu0
      %v882 = vpop.f32.mrb[0].mxu0
      %v883 = vadd.f32 0.0, %v882
      %v884 = vpop.f32.mrb[0].mxu0
      %885 = vmatprep.mubr.bf16.mxu0 0
      %886 = vmatmul.mubr.bf16.gmra.mrb[0].mxu0 %v367
      %v887 = vpop.f32.mrb[0].mxu0
      %v888 = vadd.f32 0.0, %v887
      %v889 = vpop.f32.mrb[0].mxu0
      %v890 = vpop.f32.mrb[0].mxu0
      %v891 = vadd.f32 0.0, %v890
      %v892 = vpop.f32.mrb[0].mxu0
      %893 = vmatprep.mubr.bf16.mxu0 0
      %894 = vmatmul.mubr.bf16.gmra.mrb[0].mxu0 %v370
      %v895 = vpop.f32.mrb[0].mxu0
      %v896 = vadd.f32 0.0, %v895
      %v897 = vpop.f32.mrb[0].mxu0
      %v898 = vpop.f32.mrb[0].mxu0
      %v899 = vadd.f32 0.0, %v898
      %v900 = vpop.f32.mrb[0].mxu0
      %901 = vmatprep.mubr.bf16.mxu0 0
      %902 = vmatmul.mubr.bf16.gmra.mrb[0].mxu0 %v373
      %v903 = vpop.f32.mrb[0].mxu0
      %v904 = vadd.f32 0.0, %v903
      %v905 = vpop.f32.mrb[0].mxu0
      %v906 = vpop.f32.mrb[0].mxu0
      %v907 = vadd.f32 0.0, %v906
      %v908 = vpop.f32.mrb[0].mxu0
      %909 = vmatprep.mubr.bf16.mxu0 0
      %910 = vmatmul.mubr.bf16.gmra.mrb[0].mxu0 %v376
      %v911 = vpop.f32.mrb[0].mxu0
      %v912 = vadd.f32 0.0, %v911
      %v913 = vpop.f32.mrb[0].mxu0
      %v914 = vpop.f32.mrb[0].mxu0
      %v915 = vadd.f32 0.0, %v914
      %v916 = vpop.f32.mrb[0].mxu0
      %917 = vmatprep.mubr.bf16.mxu0 0
      %918 = vmatmul.mubr.bf16.gmra.mrb[0].mxu0 %v379
      %v919 = vpop.f32.mrb[0].mxu0
      %v920 = vadd.f32 0.0, %v919
      %v921 = vpop.f32.mrb[0].mxu0
      %v922 = vpop.f32.mrb[0].mxu0
      %v923 = vadd.f32 0.0, %v922
      %v924 = vpop.f32.mrb[0].mxu0
      %925 = vmatprep.mubr.bf16.mxu0 0
      %926 = vmatmul.mubr.bf16.gmra.mrb[0].mxu0 %v382
      %v927 = vpop.f32.mrb[0].mxu0
      %v928 = vadd.f32 0.0, %v927
      %v929 = vpop.f32.mrb[0].mxu0
      %v930 = vpop.f32.mrb[0].mxu0
      %v931 = vadd.f32 0.0, %v930
      %v932 = vpop.f32.mrb[0].mxu0
      %933 = vmatprep.mubr.bf16.mxu0 0
      %934 = vmatmul.mubr.bf16.gmra.mrb[0].mxu0 %v385
      %v935 = vpop.f32.mrb[0].mxu0
      %v936 = vadd.f32 0.0, %v935
      %v937 = vpop.f32.mrb[0].mxu0
      %v938 = vpop.f32.mrb[0].mxu0
      %v939 = vadd.f32 0.0, %v938
      %v940 = vpop.f32.mrb[0].mxu0
      %941 = vdwg.mxu0
      %v942 = vmul.f32 %v816, %v556
      %v943 = vmul.f32 %v819, %v556
      %v944 = vmul.f32 %v824, %v556
      %v945 = vmul.f32 %v827, %v556
      %v946 = vmul.f32 %v832, %v556
      %v947 = vmul.f32 %v835, %v556
      %v948 = vmul.f32 %v840, %v556
      %v949 = vmul.f32 %v843, %v556
      %v950 = vmul.f32 %v848, %v556
      %v951 = vmul.f32 %v851, %v556
      %v952 = vmul.f32 %v856, %v556
      %v953 = vmul.f32 %v859, %v556
      %v954 = vmul.f32 %v864, %v556
      %v955 = vmul.f32 %v867, %v556
      %v956 = vmul.f32 %v872, %v556
      %v957 = vmul.f32 %v875, %v556
      %v958 = vmul.f32 %v880, %v556
      %v959 = vmul.f32 %v883, %v556
      %v960 = vmul.f32 %v888, %v556
      %v961 = vmul.f32 %v891, %v556
      %v962 = vmul.f32 %v896, %v556
      %v963 = vmul.f32 %v899, %v556
      %v964 = vmul.f32 %v904, %v556
      %v965 = vmul.f32 %v907, %v556
      %v966 = vmul.f32 %v912, %v556
      %v967 = vmul.f32 %v915, %v556
      %v968 = vmul.f32 %v920, %v556
      %v969 = vmul.f32 %v923, %v556
      %v970 = vmul.f32 %v928, %v556
      %v971 = vmul.f32 %v931, %v556
      %v972 = vmul.f32 %v936, %v556
      %v973 = vmul.f32 %v939, %v556
      %v974 = vadd.f32 %v942, %v594
      %v975 = vadd.f32 %v943, %v594
      %v976 = vadd.f32 %v944, %v594
      %v977 = vadd.f32 %v945, %v594
      %v978 = vadd.f32 %v946, %v594
      %v979 = vadd.f32 %v947, %v594
      %v980 = vadd.f32 %v948, %v594
      %v981 = vadd.f32 %v949, %v594
      %v982 = vadd.f32 %v950, %v594
      %v983 = vadd.f32 %v951, %v594
      %v984 = vadd.f32 %v952, %v594
      %v985 = vadd.f32 %v953, %v594
      %v986 = vadd.f32 %v954, %v594
      %v987 = vadd.f32 %v955, %v594
      %v988 = vadd.f32 %v956, %v594
      %v989 = vadd.f32 %v957, %v594
      %v990 = vadd.f32 %v958, %v594
      %v991 = vadd.f32 %v959, %v594
      %v992 = vadd.f32 %v960, %v594
      %v993 = vadd.f32 %v961, %v594
      %v994 = vadd.f32 %v962, %v594
      %v995 = vadd.f32 %v963, %v594
      %v996 = vadd.f32 %v964, %v594
      %v997 = vadd.f32 %v965, %v594
      %v998 = vadd.f32 %v966, %v594
      %v999 = vadd.f32 %v967, %v594
      %v1000 = vadd.f32 %v968, %v594
      %v1001 = vadd.f32 %v969, %v594
      %v1002 = vadd.f32 %v970, %v594
      %v1003 = vadd.f32 %v971, %v594
      %v1004 = vadd.f32 %v972, %v594
      %v1005 = vadd.f32 %v973, %v594
      %vm1006 = vcmp.ge.f32.partialorder %v974, 0.0
      %vm1007 = vcmp.ge.f32.partialorder %v975, 0.0
      %vm1008 = vcmp.ge.f32.partialorder %v976, 0.0
      %vm1009 = vcmp.ge.f32.partialorder %v977, 0.0
      %vm1010 = vcmp.ge.f32.partialorder %v978, 0.0
      %vm1011 = vcmp.ge.f32.partialorder %v979, 0.0
      %vm1012 = vcmp.ge.f32.partialorder %v980, 0.0
      %vm1013 = vcmp.ge.f32.partialorder %v981, 0.0
      %vm1014 = vcmp.ge.f32.partialorder %v982, 0.0
      %vm1015 = vcmp.ge.f32.partialorder %v983, 0.0
      %vm1016 = vcmp.ge.f32.partialorder %v984, 0.0
      %vm1017 = vcmp.ge.f32.partialorder %v985, 0.0
      %vm1018 = vcmp.ge.f32.partialorder %v986, 0.0
      %vm1019 = vcmp.ge.f32.partialorder %v987, 0.0
      %vm1020 = vcmp.ge.f32.partialorder %v988, 0.0
      %vm1021 = vcmp.ge.f32.partialorder %v989, 0.0
      %vm1022 = vcmp.ge.f32.partialorder %v990, 0.0
      %vm1023 = vcmp.ge.f32.partialorder %v991, 0.0
      %vm1024 = vcmp.ge.f32.partialorder %v992, 0.0
      %vm1025 = vcmp.ge.f32.partialorder %v993, 0.0
      %vm1026 = vcmp.ge.f32.partialorder %v994, 0.0
      %vm1027 = vcmp.ge.f32.partialorder %v995, 0.0
      %vm1028 = vcmp.ge.f32.partialorder %v996, 0.0
      %vm1029 = vcmp.ge.f32.partialorder %v997, 0.0
      %vm1030 = vcmp.ge.f32.partialorder %v998, 0.0
      %vm1031 = vcmp.ge.f32.partialorder %v999, 0.0
      %vm1032 = vcmp.ge.f32.partialorder %v1000, 0.0
      %vm1033 = vcmp.ge.f32.partialorder %v1001, 0.0
      %vm1034 = vcmp.ge.f32.partialorder %v1002, 0.0
      %vm1035 = vcmp.ge.f32.partialorder %v1003, 0.0
      %vm1036 = vcmp.ge.f32.partialorder %v1004, 0.0
      %vm1037 = vcmp.ge.f32.partialorder %v1005, 0.0
      %v1038 = vmul.f32 %v974, 0.2
      %v1039 = vmul.f32 %v975, 0.2
      %v1040 = vmul.f32 %v976, 0.2
      %v1041 = vmul.f32 %v977, 0.2
      %v1042 = vmul.f32 %v978, 0.2
      %v1043 = vmul.f32 %v979, 0.2
      %v1044 = vmul.f32 %v980, 0.2
      %v1045 = vmul.f32 %v981, 0.2
      %v1046 = vmul.f32 %v982, 0.2
      %v1047 = vmul.f32 %v983, 0.2
      %v1048 = vmul.f32 %v984, 0.2
      %v1049 = vmul.f32 %v985, 0.2
      %v1050 = vmul.f32 %v986, 0.2
      %v1051 = vmul.f32 %v987, 0.2
      %v1052 = vmul.f32 %v988, 0.2
      %v1053 = vmul.f32 %v989, 0.2
      %v1054 = vmul.f32 %v990, 0.2
      %v1055 = vmul.f32 %v991, 0.2
      %v1056 = vmul.f32 %v992, 0.2
      %v1057 = vmul.f32 %v993, 0.2
      %v1058 = vmul.f32 %v994, 0.2
      %v1059 = vmul.f32 %v995, 0.2
      %v1060 = vmul.f32 %v996, 0.2
      %v1061 = vmul.f32 %v997, 0.2
      %v1062 = vmul.f32 %v998, 0.2
      %v1063 = vmul.f32 %v999, 0.2
      %v1064 = vmul.f32 %v1000, 0.2
      %v1065 = vmul.f32 %v1001, 0.2
      %v1066 = vmul.f32 %v1002, 0.2
      %v1067 = vmul.f32 %v1003, 0.2
      %v1068 = vmul.f32 %v1004, 0.2
      %v1069 = vmul.f32 %v1005, 0.2
      %v1070 = vsel %vm1006, %v974, %v1038
      %v1071 = vsel %vm1007, %v975, %v1039
      %v1072 = vsel %vm1008, %v976, %v1040
      %v1073 = vsel %vm1009, %v977, %v1041
      %v1074 = vsel %vm1010, %v978, %v1042
      %v1075 = vsel %vm1011, %v979, %v1043
      %v1076 = vsel %vm1012, %v980, %v1044
      %v1077 = vsel %vm1013, %v981, %v1045
      %v1078 = vsel %vm1014, %v982, %v1046
      %v1079 = vsel %vm1015, %v983, %v1047
      %v1080 = vsel %vm1016, %v984, %v1048
      %v1081 = vsel %vm1017, %v985, %v1049
      %v1082 = vsel %vm1018, %v986, %v1050
      %v1083 = vsel %vm1019, %v987, %v1051
      %v1084 = vsel %vm1020, %v988, %v1052
      %v1085 = vsel %vm1021, %v989, %v1053
      %v1086 = vsel %vm1022, %v990, %v1054
      %v1087 = vsel %vm1023, %v991, %v1055
      %v1088 = vsel %vm1024, %v992, %v1056
      %v1089 = vsel %vm1025, %v993, %v1057
      %v1090 = vsel %vm1026, %v994, %v1058
      %v1091 = vsel %vm1027, %v995, %v1059
      %v1092 = vsel %vm1028, %v996, %v1060
      %v1093 = vsel %vm1029, %v997, %v1061
      %v1094 = vsel %vm1030, %v998, %v1062
      %v1095 = vsel %vm1031, %v999, %v1063
      %v1096 = vsel %vm1032, %v1000, %v1064
      %v1097 = vsel %vm1033, %v1001, %v1065
      %v1098 = vsel %vm1034, %v1002, %v1066
      %v1099 = vsel %vm1035, %v1003, %v1067
      %v1100 = vsel %vm1036, %v1004, %v1068
      %v1101 = vsel %vm1037, %v1005, %v1069
      %s1102 = scalar_lea.vmem %s201, 16
      %1103 = vst.msk [vmem:[%s1102] sm:$0xff] %vm724, %v1070
      %1104 = vst.msk [vmem:[%s1102 + $0x8] sm:$0xff] %vm724, %v1071
      %1105 = vst.msk [vmem:[%s1102 + $0x20] sm:$0xff] %vm724, %v1072
      %1106 = vst.msk [vmem:[%s1102 + $0x28] sm:$0xff] %vm724, %v1073
      %1107 = vst.msk [vmem:[%s1102 + $0x40] sm:$0xff] %vm724, %v1074
      %1108 = vst.msk [vmem:[%s1102 + $0x48] sm:$0xff] %vm724, %v1075
      %1109 = vst.msk [vmem:[%s1102 + $0x60] sm:$0xff] %vm724, %v1076
      %1110 = vst.msk [vmem:[%s1102 + $0x68] sm:$0xff] %vm724, %v1077
      %1111 = vst.msk [vmem:[%s1102 + $0x80] sm:$0xff] %vm724, %v1078
      %1112 = vst.msk [vmem:[%s1102 + $0x88] sm:$0xff] %vm724, %v1079
      %1113 = vst.msk [vmem:[%s1102 + $0xa0] sm:$0xff] %vm724, %v1080
      %1114 = vst.msk [vmem:[%s1102 + $0xa8] sm:$0xff] %vm724, %v1081
      %1115 = vst.msk [vmem:[%s1102 + $0xc0] sm:$0xff] %vm724, %v1082
      %1116 = vst.msk [vmem:[%s1102 + $0xc8] sm:$0xff] %vm724, %v1083
      %1117 = vst.msk [vmem:[%s1102 + $0xe0] sm:$0xff] %vm724, %v1084
      %1118 = vst.msk [vmem:[%s1102 + $0xe8] sm:$0xff] %vm724, %v1085
      %1119 = vst.msk [vmem:[%s1102 + $0x100] sm:$0xff] %vm724, %v1086
      %1120 = vst.msk [vmem:[%s1102 + $0x108] sm:$0xff] %vm724, %v1087
      %1121 = vst.msk [vmem:[%s1102 + $0x120] sm:$0xff] %vm724, %v1088
      %1122 = vst.msk [vmem:[%s1102 + $0x128] sm:$0xff] %vm724, %v1089
      %1123 = vst.msk [vmem:[%s1102 + $0x140] sm:$0xff] %vm724, %v1090
      %1124 = vst.msk [vmem:[%s1102 + $0x148] sm:$0xff] %vm724, %v1091
      %1125 = vst.msk [vmem:[%s1102 + $0x160] sm:$0xff] %vm724, %v1092
      %1126 = vst.msk [vmem:[%s1102 + $0x168] sm:$0xff] %vm724, %v1093
      %1127 = vst.msk [vmem:[%s1102 + $0x180] sm:$0xff] %vm724, %v1094
      %1128 = vst.msk [vmem:[%s1102 + $0x188] sm:$0xff] %vm724, %v1095
      %1129 = vst.msk [vmem:[%s1102 + $0x1a0] sm:$0xff] %vm724, %v1096
      %1130 = vst.msk [vmem:[%s1102 + $0x1a8] sm:$0xff] %vm724, %v1097
      %1131 = vst.msk [vmem:[%s1102 + $0x1c0] sm:$0xff] %vm724, %v1098
      %1132 = vst.msk [vmem:[%s1102 + $0x1c8] sm:$0xff] %vm724, %v1099
      %1133 = vst.msk [vmem:[%s1102 + $0x1e0] sm:$0xff] %vm724, %v1100
      %1134 = vst.msk [vmem:[%s1102 + $0x1e8] sm:$0xff] %vm724, %v1101
      %s1135 = smul.u32 16, %s15
      %p1136 = scmp.lt.s32.totalorder %s1135, 31
      %s1137 = scalar_select %p1136, %s1135, 31
      %s1138 = smul.addr %s1137, 4
      %s1139 = smul.addr %s1138, 8
      %s1140 = scalar_lea.vmem %s4, %s1139
      // Predicated region
      $region37: #{dc_up_block.3} parent=35 // pred_check
        %p1141 = pneg %p122
      $region38: #{dc_up_block.3} parent=35 // pred_check_branch
        %1143 = sbr.rel (%p1141) target = $region40
      $region39: #{dc_up_block.3} parent=35 // pred_region
        %s1144 = smul.u32 16, %s15
      $region40: #{dc_up_block.3} parent=35 // pred_fallthru
        _
    $region36: #{dc_up_block.3} parent=5 // pred_fallthru
      _
    %p1145 = scmp.le.s32.totalorder 2, %s10
    // Predicated region
    $region41: #{dc_up_block.3} parent=5 // pred_check
      %p1146 = pneg %p1145
    $region42: #{dc_up_block.3} parent=5 // pred_check_branch
      %1148 = sbr.rel (%p1146) target = $region44
    $region43: #{dc_up_block.3} parent=5 // pred_region
      %s1149 = ssub.s32 %s10, 2
      // Predicated region
      $region45: #{dc_up_block.3} parent=43 // pred_check
        %p1150 = pneg %p128
      $region46: #{dc_up_block.3} parent=43 // pred_check_branch
        %1152 = sbr.rel (%p1150) target = $region48
      $region47: #{dc_up_block.3} parent=43 // pred_region
        %s1153 = smul.u32 16, %s16
        %p1154 = scmp.lt.s32.totalorder %s1153, 31
        %s1155 = scalar_select %p1154, %s1153, 31
        %s1156 = smul.addr %s1155, 4
        %s1157 = smul.addr %s1156, 8
        %s1158 = scalar_lea.vmem %s4, %s1157
      $region48: #{dc_up_block.3} parent=43 // pred_fallthru
        _
    $region44: #{dc_up_block.3} parent=5 // pred_fallthru
      _
  $region6: #{dc_up_block.3} parent=0 // loop_footer
    %s14 = sadd.s32 1, %s10
  $region7: #{dc_up_block.3} parent=0 // loop_footer_branch
    %9 = sbr.rel target = $region3
  $region8: #{dc_up_block.3} parent=0 // loop_exit
    _

</llo_original>
